<compile_context>
chip_gen: v7x
topology: tpu7x:2x2x1
jax: 0.10.0
libtpu: 0.0.40
codegen_flags: <defaults>
</compile_context>

<pallas_src>
import numpy as np
import jax
import jax.numpy as jnp
from jax.experimental import pallas as pl
from jax.experimental.pallas import tpu as pltpu


def _pick_group_block(G, per_group_bytes, budget=4 << 20):
    """Largest divisor of G whose per-step bytes fit the budget and which keeps >=2 grid
    steps (so the G axis can shard across v7x's two TensorCores)."""
    best = 1
    for d in range(1, G + 1):
        if G % d:
            continue
        if d * per_group_bytes > budget:
            continue
        if G >= 2 and G // d < 2:
            continue
        best = d
    return best


def _make_kernel(Gb, B, last_layer, eps=1e-5, slope=0.2):
    inv_b = 1.0 / B

    def kernel(x_ref, w_ref, gamma_ref, beta_ref, p_ref, o_ref):
        for j in range(Gb):                               # Gb is small & static -> unrolled
            x = x_ref[j]                                  # (B, K)
            w = w_ref[j]                                  # (K, nc*S)
            # grouped ConvTranspose2d: all nc output channels fused into one MXU matmul
            y = jnp.dot(x, w, preferred_element_type=jnp.float32)      # (B, nc*S) f32
            if not last_layer:
                # Training-mode BatchNorm2d per global channel (g*nc + oc), stats over
                # (batch, uk, uk) == the S-lane block of this row. One pass: E[y], E[y^2].
                s1 = jnp.sum(y, axis=0, keepdims=True) * inv_b          # (1, nc*S)
                s2 = jnp.sum(y * y, axis=0, keepdims=True) * inv_b      # (1, nc*S)
                # block-averaging matmul: reduces over each channel's S lanes AND
                # broadcasts the result back to the same lane layout in one op.
                mean = jnp.dot(s1, p_ref[...], preferred_element_type=jnp.float32)
                ey2 = jnp.dot(s2, p_ref[...], preferred_element_type=jnp.float32)
                var = ey2 - mean * mean                                  # biased variance
                scale = jax.lax.rsqrt(var + eps) * gamma_ref[j]          # (1, nc*S)
                shift = beta_ref[j] - mean * scale
                y = y * scale + shift
                y = jnp.where(y >= 0, y, slope * y)                      # LeakyReLU(0.2)
            o_ref[j] = y.astype(o_ref.dtype)

    return kernel


def prepare_decoder_params(wt, gamma, beta, *, nc, nz, h, w, unfold_kernel,
                           unfold_stride, conv_stride, conv_padding, conv_kernel,
                           last_layer=False, compute_dtype=jnp.bfloat16):
    """Weight-only preprocessing (hoist out of the per-forward path; amortizes to zero
    when weights are reused across microbatches / inference)."""
    cs, pad, ck = conv_stride, conv_padding, conv_kernel
    uk, us = unfold_kernel, unfold_stride
    kp = uk // cs
    H, W = h // us, w // us
    G = H * W
    K = nz * kp * kp
    S = uk * uk
    N = nc * S

    # grouped ConvTranspose2d weight (G*nz, nc, ck, ck) -> equivalent matrix (G, K, nc*S)
    wtr = wt.reshape(G, nz, nc, ck, ck)
    iy = jnp.arange(kp)
    oy = jnp.arange(uk)
    kk = oy[None, :] - iy[:, None] * cs + pad               # kernel tap index, (kp, uk)
    valid = (kk >= 0) & (kk < ck)
    kkc = jnp.clip(kk, 0, ck - 1)
    # gather taps: (G, nz, nc, kp(iy), uk(y), kp(ix), uk(x))
    weq = wtr[:, :, :, kkc[:, :, None, None], kkc[None, None, :, :]]
    weq = weq * (valid[:, :, None, None] & valid[None, None, :, :])[None, None, None]
    # -> (G, nz(c), iy, ix, nc, y, x) -> (G, K, nc*S) with lane-dense, oc-major columns
    weq = weq.transpose(0, 1, 3, 5, 2, 4, 6).reshape(G, K, N).astype(compute_dtype)

    # BN affine params expanded to per-group lane vectors (each channel value repeated S times)
    if last_layer:
        gamma_vec = jnp.zeros((G, 1, N), jnp.float32)
        beta_vec = jnp.zeros((G, 1, N), jnp.float32)
    else:
        gamma_vec = jnp.repeat(gamma.reshape(G, nc), S, axis=1).reshape(G, 1, N).astype(jnp.float32)
        beta_vec = jnp.repeat(beta.reshape(G, nc), S, axis=1).reshape(G, 1, N).astype(jnp.float32)

    # block-averaging matrix: P[i, j] = 1/S if i, j belong to the same channel block
    blk = np.arange(N) // S
    p_avg = jnp.asarray((blk[:, None] == blk[None, :]).astype(np.float32) / S)

    return weq, gamma_vec, beta_vec, p_avg


def decoder_apply(x, weq, gamma_vec, beta_vec, p_avg, *, nc, nz, h, w, unfold_kernel,
                  unfold_stride, conv_stride, conv_padding, conv_kernel,
                  last_layer=False, compute_dtype=jnp.bfloat16):
    B = x.shape[0]
    cs, pad, ck = conv_stride, conv_padding, conv_kernel
    uk, us = unfold_kernel, unfold_stride
    assert uk == us, "implemented for non-overlapping patches (unfold_kernel == unfold_stride)"
    # TODO(synk): overlapping nn.Fold (unfold_kernel > unfold_stride) would need a scatter-add fold.
    kp = uk // cs
    H, W = h // us, w // us
    G = H * W
    K = nz * kp * kp
    S = uk * uk
    N = nc * S
    assert (kp - 1) * cs - 2 * pad + ck == uk, "ConvTranspose2d output must be uk x uk"

    # ---- glue: nn.Unfold + permutes -> per-group patch matrix (G, B, K), K = (c, iy, ix)
    xp = x.reshape(B, nz, H, kp, W, kp).transpose(2, 4, 0, 1, 3, 5).reshape(G, B, K)
    xp = xp.astype(compute_dtype)

    # groups per grid step: amortize per-step overhead, keep >=2 steps for v7x megacore,
    # stay far below the 64 MiB v7x VMEM budget (double-buffered tiles).
    itemsize = np.dtype(compute_dtype).itemsize
    per_group_bytes = (K * N + B * K) * itemsize + B * N * 4 + 2 * N * 4
    Gb = _pick_group_block(G, per_group_bytes)
    grid = (G // Gb,)

    kernel = _make_kernel(Gb, B, last_layer)
    out = pl.pallas_call(
        kernel,
        out_shape=jax.ShapeDtypeStruct((G, B, N), jnp.float32),
        grid=grid,
        in_specs=[
            pl.BlockSpec((Gb, B, K), lambda i: (i, 0, 0)),      # x patches
            pl.BlockSpec((Gb, K, N), lambda i: (i, 0, 0)),      # equivalent conv matrix
            pl.BlockSpec((Gb, 1, N), lambda i: (i, 0, 0)),      # gamma (lane-expanded)
            pl.BlockSpec((Gb, 1, N), lambda i: (i, 0, 0)),      # beta  (lane-expanded)
            pl.BlockSpec((N, N), lambda i: (0, 0)),             # block-averaging matrix
        ],
        out_specs=pl.BlockSpec((Gb, B, N), lambda i: (i, 0, 0)),
        compiler_params=pltpu.CompilerParams(dimension_semantics=("parallel",)),
    )(xp, weq, gamma_vec, beta_vec, p_avg)

    # ---- glue: nn.Fold (non-overlapping, uk == us) back to NCHW (B, nc, h, w)
    out = out.reshape(H, W, B, nc, uk, uk)
    out = out.transpose(2, 3, 0, 4, 1, 5).reshape(B, nc, h, w)
    return out


def decoder_layer_f(x, wt, gamma, beta, *, compute_dtype=jnp.bfloat16, **cfg):
    params = prepare_decoder_params(wt, gamma, beta, compute_dtype=compute_dtype, **cfg)
    return decoder_apply(x, *params, compute_dtype=compute_dtype, **cfg)


def reference_forward(x, wt, gamma, beta, *, nc, nz, h, w, unfold_kernel,
                      unfold_stride, conv_stride, conv_padding, conv_kernel,
                      last_layer=False, eps=1e-5):
    """Pure numpy replica of the PyTorch forward (training-mode BatchNorm)."""
    x = np.asarray(x, np.float64)
    wt = np.asarray(wt, np.float64)
    gamma = np.asarray(gamma, np.float64)
    beta = np.asarray(beta, np.float64)
    B = x.shape[0]
    cs, pad, ck = conv_stride, conv_padding, conv_kernel
    uk, us = unfold_kernel, unfold_stride
    kp = uk // cs
    H, W = h // us, w // us
    G = H * W
    # unfold + permute
    pat = x.reshape(B, nz, H, kp, W, kp).transpose(0, 2, 4, 1, 3, 5).reshape(B, G, nz, kp, kp)
    wtr = wt.reshape(G, nz, nc, ck, ck)
    full = (kp - 1) * cs + ck
    buf = np.zeros((B, G, nc, full, full))
    for iy in range(kp):
        for ix in range(kp):
            contrib = np.einsum('bgc,gcokl->bgokl', pat[:, :, :, iy, ix], wtr)
            buf[:, :, :, iy * cs:iy * cs + ck, ix * cs:ix * cs + ck] += contrib
    y = buf[:, :, :, pad:pad + uk, pad:pad + uk]            # (B, G, nc, uk, uk)
    if not last_layer:
        mean = y.mean(axis=(0, 3, 4), keepdims=True)
        var = y.var(axis=(0, 3, 4), keepdims=True)
        ga = gamma.reshape(1, G, nc, 1, 1)
        be = beta.reshape(1, G, nc, 1, 1)
        y = (y - mean) / np.sqrt(var + eps) * ga + be
        y = np.where(y >= 0, y, 0.2 * y)
    out = y.reshape(B, H, W, nc, uk, uk).transpose(0, 3, 1, 4, 2, 5).reshape(B, nc, h, w)
    return out


if __name__ == "__main__":
    # small config consistent with the module's asserts
    nc_, nz_ = 4, 4                       # nz == nc so BatchNorm2d(H*W*nz) matches conv output channels
    h_ = w_ = 16
    conv_stride_, conv_padding_, conv_kernel_ = 2, 1, 4
    hlatent_, wlatent_ = h_ // conv_stride_, w_ // conv_stride_
    unfold_kernel_ = unfold_stride_ = 8
    last_layer_ = False

    H_, W_ = h_ // unfold_stride_, w_ // unfold_stride_
    G_ = H_ * W_
    B_ = 2

    key = jax.random.PRNGKey(0)
    k1, k2, k3, k4 = jax.random.split(key, 4)
    x = jax.random.normal(k1, (B_, nz_, hlatent_, wlatent_), jnp.float32)
    # ConvTranspose2d weight layout: (in_channels, out_channels // groups, kH, kW)
    wt = 0.1 * jax.random.normal(k2, (G_ * nz_, nc_, conv_kernel_, conv_kernel_), jnp.float32)
    # BatchNorm2d(H*W*nz) affine params (deterministic random init)
    gamma = 1.0 + 0.1 * jax.random.normal(k3, (G_ * nz_,), jnp.float32)
    beta = 0.1 * jax.random.normal(k4, (G_ * nz_,), jnp.float32)

    cfg = dict(nc=nc_, nz=nz_, h=h_, w=w_, unfold_kernel=unfold_kernel_,
               unfold_stride=unfold_stride_, conv_stride=conv_stride_,
               conv_padding=conv_padding_, conv_kernel=conv_kernel_,
               last_layer=last_layer_)

    ref = reference_forward(x, wt, gamma, beta, **cfg)

    # f32 compute path: tight correctness check against float64 reference
    out_f32 = decoder_layer_f(x, wt, gamma, beta, compute_dtype=jnp.float32, **cfg)
    out_f32 = jax.block_until_ready(out_f32)
    assert out_f32.shape == (B_, nc_, h_, w_), out_f32.shape
    np.testing.assert_allclose(np.asarray(out_f32), ref, rtol=1e-4, atol=1e-4)

    # bf16 compute path (fast path): weight preprocessing hoisted via prepare_decoder_params
    params = prepare_decoder_params(wt, gamma, beta, compute_dtype=jnp.bfloat16, **cfg)
    out_bf16 = decoder_apply(x, *params, compute_dtype=jnp.bfloat16, **cfg)
    out_bf16 = jax.block_until_ready(out_bf16)
    assert out_bf16.shape == (B_, nc_, h_, w_), out_bf16.shape
    np.testing.assert_allclose(np.asarray(out_bf16), ref, rtol=3e-2, atol=3e-2)

    print("KERNEL_OK")
</pallas_src>

<mosaic_0001>
module attributes {stable_mosaic.version = 11 : i64} {
  func.func @kernel(%arg0: i32, %arg1: memref<2x2x64xf32, #tpu.memory_space<vmem>>, %arg2: memref<2x64x256xf32, #tpu.memory_space<vmem>>, %arg3: memref<2x1x256xf32, #tpu.memory_space<vmem>>, %arg4: memref<2x1x256xf32, #tpu.memory_space<vmem>>, %arg5: memref<256x256xf32, #tpu.memory_space<vmem>>, %arg6: memref<2x2x256xf32, #tpu.memory_space<vmem>>) attributes {dimension_semantics = [#tpu.dimension_semantics<parallel>], iteration_bounds = array<i64: 2>, scalar_prefetch = 0 : i64, scratch_operands = 0 : i64, tpu.core_type = #tpu.core_type<tc>, window_params = [{transform_indices = @transform_0, window_bounds = array<i64: 2, 2, 64>}, {transform_indices = @transform_1, window_bounds = array<i64: 2, 64, 256>}, {transform_indices = @transform_2, window_bounds = array<i64: 2, 1, 256>}, {transform_indices = @transform_3, window_bounds = array<i64: 2, 1, 256>}, {pipeline_mode = #tpu.pipeline_mode<synchronous>, transform_indices = @transform_4, window_bounds = array<i64: 256, 256>}, {transform_indices = @transform_5, window_bounds = array<i64: 2, 2, 256>}]} {
    %c0 = arith.constant 0 : index
    %c0_0 = arith.constant 0 : index
    %c0_1 = arith.constant 0 : index
    %0 = vector.load %arg1[%c0, %c0_0, %c0_1] : memref<2x2x64xf32, #tpu.memory_space<vmem>>, vector<1x2x64xf32>
    %1 = vector.shape_cast %0 : vector<1x2x64xf32> to vector<2x64xf32>
    %c0_2 = arith.constant 0 : index
    %c0_3 = arith.constant 0 : index
    %c0_4 = arith.constant 0 : index
    %2 = vector.load %arg2[%c0_2, %c0_3, %c0_4] : memref<2x64x256xf32, #tpu.memory_space<vmem>>, vector<1x64x256xf32>
    %3 = vector.shape_cast %2 : vector<1x64x256xf32> to vector<64x256xf32>
    %cst = arith.constant dense<0.000000e+00> : vector<2x256xf32>
    %4 = tpu.matmul %1, %3, %cst {dimension_numbers = #tpu.dot_dimension_numbers<[1], [0], [0], [1], [0, 0, 1, 1], [], []>} : vector<2x64xf32>, vector<64x256xf32>, vector<2x256xf32> -> vector<2x256xf32>
    %cst_5 = arith.constant dense<0.000000e+00> : vector<256xf32>
    %5 = vector.multi_reduction <add>, %4, %cst_5 [0] : vector<2x256xf32> to vector<256xf32>
    %6 = vector.shape_cast %5 : vector<256xf32> to vector<1x256xf32>
    %cst_6 = arith.constant 5.000000e-01 : f32
    %7 = vector.broadcast %cst_6 : f32 to vector<1x256xf32>
    %8 = arith.mulf %6, %7 : vector<1x256xf32>
    %9 = arith.mulf %4, %4 : vector<2x256xf32>
    %cst_7 = arith.constant dense<0.000000e+00> : vector<256xf32>
    %10 = vector.multi_reduction <add>, %9, %cst_7 [0] : vector<2x256xf32> to vector<256xf32>
    %11 = vector.shape_cast %10 : vector<256xf32> to vector<1x256xf32>
    %cst_8 = arith.constant 5.000000e-01 : f32
    %12 = vector.broadcast %cst_8 : f32 to vector<1x256xf32>
    %13 = arith.mulf %11, %12 : vector<1x256xf32>
    %c0_9 = arith.constant 0 : index
    %c0_10 = arith.constant 0 : index
    %14 = vector.load %arg5[%c0_9, %c0_10] : memref<256x256xf32, #tpu.memory_space<vmem>>, vector<256x256xf32>
    %cst_11 = arith.constant dense<0.000000e+00> : vector<1x256xf32>
    %15 = tpu.matmul %8, %14, %cst_11 {dimension_numbers = #tpu.dot_dimension_numbers<[1], [0], [0], [1], [0, 0, 1, 1], [], []>} : vector<1x256xf32>, vector<256x256xf32>, vector<1x256xf32> -> vector<1x256xf32>
    %c0_12 = arith.constant 0 : index
    %c0_13 = arith.constant 0 : index
    %16 = vector.load %arg5[%c0_12, %c0_13] : memref<256x256xf32, #tpu.memory_space<vmem>>, vector<256x256xf32>
    %cst_14 = arith.constant dense<0.000000e+00> : vector<1x256xf32>
    %17 = tpu.matmul %13, %16, %cst_14 {dimension_numbers = #tpu.dot_dimension_numbers<[1], [0], [0], [1], [0, 0, 1, 1], [], []>} : vector<1x256xf32>, vector<256x256xf32>, vector<1x256xf32> -> vector<1x256xf32>
    %18 = arith.mulf %15, %15 : vector<1x256xf32>
    %19 = arith.subf %17, %18 : vector<1x256xf32>
    %cst_15 = arith.constant 9.99999974E-6 : f32
    %20 = vector.broadcast %cst_15 : f32 to vector<1x256xf32>
    %21 = arith.addf %19, %20 : vector<1x256xf32>
    %22 = math.rsqrt %21 : vector<1x256xf32>
    %c0_16 = arith.constant 0 : index
    %c0_17 = arith.constant 0 : index
    %c0_18 = arith.constant 0 : index
    %23 = vector.load %arg3[%c0_16, %c0_17, %c0_18] : memref<2x1x256xf32, #tpu.memory_space<vmem>>, vector<1x1x256xf32>
    %24 = vector.shape_cast %23 : vector<1x1x256xf32> to vector<1x256xf32>
    %25 = arith.mulf %22, %24 : vector<1x256xf32>
    %c0_19 = arith.constant 0 : index
    %c0_20 = arith.constant 0 : index
    %c0_21 = arith.constant 0 : index
    %26 = vector.load %arg4[%c0_19, %c0_20, %c0_21] : memref<2x1x256xf32, #tpu.memory_space<vmem>>, vector<1x1x256xf32>
    %27 = vector.shape_cast %26 : vector<1x1x256xf32> to vector<1x256xf32>
    %28 = arith.mulf %15, %25 : vector<1x256xf32>
    %29 = arith.subf %27, %28 : vector<1x256xf32>
    %30 = vector.broadcast %25 : vector<1x256xf32> to vector<2x256xf32>
    %31 = arith.mulf %4, %30 : vector<2x256xf32>
    %32 = vector.broadcast %29 : vector<1x256xf32> to vector<2x256xf32>
    %33 = arith.addf %31, %32 : vector<2x256xf32>
    %cst_22 = arith.constant 0.000000e+00 : f32
    %34 = vector.broadcast %cst_22 : f32 to vector<2x256xf32>
    %35 = arith.cmpf oge, %33, %34 : vector<2x256xf32>
    %cst_23 = arith.constant 2.000000e-01 : f32
    %36 = vector.broadcast %cst_23 : f32 to vector<2x256xf32>
    %37 = arith.mulf %36, %33 : vector<2x256xf32>
    %38 = arith.select %35, %33, %37 : vector<2x256xi1>, vector<2x256xf32>
    %c0_24 = arith.constant 0 : index
    %c0_25 = arith.constant 0 : index
    %c0_26 = arith.constant 0 : index
    %39 = vector.load %arg6[%c0_24, %c0_25, %c0_26] : memref<2x2x256xf32, #tpu.memory_space<vmem>>, vector<1x2x256xf32>
    %40 = vector.shape_cast %39 : vector<1x2x256xf32> to vector<2x256xf32>
    %41 = vector.shape_cast %38 : vector<2x256xf32> to vector<1x2x256xf32>
    tpu.vector_store %arg6[%c0_24, %c0_25, %c0_26], %41 {strides = array<i32>} : memref<2x2x256xf32, #tpu.memory_space<vmem>>, vector<1x2x256xf32>,
    %c1 = arith.constant 1 : index
    %c0_27 = arith.constant 0 : index
    %c0_28 = arith.constant 0 : index
    %42 = vector.load %arg1[%c1, %c0_27, %c0_28] : memref<2x2x64xf32, #tpu.memory_space<vmem>>, vector<1x2x64xf32>
    %43 = vector.shape_cast %42 : vector<1x2x64xf32> to vector<2x64xf32>
    %c1_29 = arith.constant 1 : index
    %c0_30 = arith.constant 0 : index
    %c0_31 = arith.constant 0 : index
    %44 = vector.load %arg2[%c1_29, %c0_30, %c0_31] : memref<2x64x256xf32, #tpu.memory_space<vmem>>, vector<1x64x256xf32>
    %45 = vector.shape_cast %44 : vector<1x64x256xf32> to vector<64x256xf32>
    %cst_32 = arith.constant dense<0.000000e+00> : vector<2x256xf32>
    %46 = tpu.matmul %43, %45, %cst_32 {dimension_numbers = #tpu.dot_dimension_numbers<[1], [0], [0], [1], [0, 0, 1, 1], [], []>} : vector<2x64xf32>, vector<64x256xf32>, vector<2x256xf32> -> vector<2x256xf32>
    %cst_33 = arith.constant dense<0.000000e+00> : vector<256xf32>
    %47 = vector.multi_reduction <add>, %46, %cst_33 [0] : vector<2x256xf32> to vector<256xf32>
    %48 = vector.shape_cast %47 : vector<256xf32> to vector<1x256xf32>
    %cst_34 = arith.constant 5.000000e-01 : f32
    %49 = vector.broadcast %cst_34 : f32 to vector<1x256xf32>
    %50 = arith.mulf %48, %49 : vector<1x256xf32>
    %51 = arith.mulf %46, %46 : vector<2x256xf32>
    %cst_35 = arith.constant dense<0.000000e+00> : vector<256xf32>
    %52 = vector.multi_reduction <add>, %51, %cst_35 [0] : vector<2x256xf32> to vector<256xf32>
    %53 = vector.shape_cast %52 : vector<256xf32> to vector<1x256xf32>
    %cst_36 = arith.constant 5.000000e-01 : f32
    %54 = vector.broadcast %cst_36 : f32 to vector<1x256xf32>
    %55 = arith.mulf %53, %54 : vector<1x256xf32>
    %c0_37 = arith.constant 0 : index
    %c0_38 = arith.constant 0 : index
    %56 = vector.load %arg5[%c0_37, %c0_38] : memref<256x256xf32, #tpu.memory_space<vmem>>, vector<256x256xf32>
    %cst_39 = arith.constant dense<0.000000e+00> : vector<1x256xf32>
    %57 = tpu.matmul %50, %56, %cst_39 {dimension_numbers = #tpu.dot_dimension_numbers<[1], [0], [0], [1], [0, 0, 1, 1], [], []>} : vector<1x256xf32>, vector<256x256xf32>, vector<1x256xf32> -> vector<1x256xf32>
    %c0_40 = arith.constant 0 : index
    %c0_41 = arith.constant 0 : index
    %58 = vector.load %arg5[%c0_40, %c0_41] : memref<256x256xf32, #tpu.memory_space<vmem>>, vector<256x256xf32>
    %cst_42 = arith.constant dense<0.000000e+00> : vector<1x256xf32>
    %59 = tpu.matmul %55, %58, %cst_42 {dimension_numbers = #tpu.dot_dimension_numbers<[1], [0], [0], [1], [0, 0, 1, 1], [], []>} : vector<1x256xf32>, vector<256x256xf32>, vector<1x256xf32> -> vector<1x256xf32>
    %60 = arith.mulf %57, %57 : vector<1x256xf32>
    %61 = arith.subf %59, %60 : vector<1x256xf32>
    %cst_43 = arith.constant 9.99999974E-6 : f32
    %62 = vector.broadcast %cst_43 : f32 to vector<1x256xf32>
    %63 = arith.addf %61, %62 : vector<1x256xf32>
    %64 = math.rsqrt %63 : vector<1x256xf32>
    %c1_44 = arith.constant 1 : index
    %c0_45 = arith.constant 0 : index
    %c0_46 = arith.constant 0 : index
    %65 = vector.load %arg3[%c1_44, %c0_45, %c0_46] : memref<2x1x256xf32, #tpu.memory_space<vmem>>, vector<1x1x256xf32>
    %66 = vector.shape_cast %65 : vector<1x1x256xf32> to vector<1x256xf32>
    %67 = arith.mulf %64, %66 : vector<1x256xf32>
    %c1_47 = arith.constant 1 : index
    %c0_48 = arith.constant 0 : index
    %c0_49 = arith.constant 0 : index
    %68 = vector.load %arg4[%c1_47, %c0_48, %c0_49] : memref<2x1x256xf32, #tpu.memory_space<vmem>>, vector<1x1x256xf32>
    %69 = vector.shape_cast %68 : vector<1x1x256xf32> to vector<1x256xf32>
    %70 = arith.mulf %57, %67 : vector<1x256xf32>
    %71 = arith.subf %69, %70 : vector<1x256xf32>
    %72 = vector.broadcast %67 : vector<1x256xf32> to vector<2x256xf32>
    %73 = arith.mulf %46, %72 : vector<2x256xf32>
    %74 = vector.broadcast %71 : vector<1x256xf32> to vector<2x256xf32>
    %75 = arith.addf %73, %74 : vector<2x256xf32>
    %cst_50 = arith.constant 0.000000e+00 : f32
    %76 = vector.broadcast %cst_50 : f32 to vector<2x256xf32>
    %77 = arith.cmpf oge, %75, %76 : vector<2x256xf32>
    %cst_51 = arith.constant 2.000000e-01 : f32
    %78 = vector.broadcast %cst_51 : f32 to vector<2x256xf32>
    %79 = arith.mulf %78, %75 : vector<2x256xf32>
    %80 = arith.select %77, %75, %79 : vector<2x256xi1>, vector<2x256xf32>
    %c1_52 = arith.constant 1 : index
    %c0_53 = arith.constant 0 : index
    %c0_54 = arith.constant 0 : index
    %81 = vector.load %arg6[%c1_52, %c0_53, %c0_54] : memref<2x2x256xf32, #tpu.memory_space<vmem>>, vector<1x2x256xf32>
    %82 = vector.shape_cast %81 : vector<1x2x256xf32> to vector<2x256xf32>
    %83 = vector.shape_cast %80 : vector<2x256xf32> to vector<1x2x256xf32>
    tpu.vector_store %arg6[%c1_52, %c0_53, %c0_54], %83 {strides = array<i32>} : memref<2x2x256xf32, #tpu.memory_space<vmem>>, vector<1x2x256xf32>,
    return
  }
  func.func @transform_0(%arg0: i32) -> (i32, i32, i32) {
    %c0_i32 = arith.constant 0 : i32
    %c0_i32_0 = arith.constant 0 : i32
    %c0_i32_1 = arith.constant 0 : i32
    return %arg0, %c0_i32, %c0_i32_0 : i32, i32, i32
  }
  func.func @transform_1(%arg0: i32) -> (i32, i32, i32) {
    %c0_i32 = arith.constant 0 : i32
    %c0_i32_0 = arith.constant 0 : i32
    %c0_i32_1 = arith.constant 0 : i32
    return %arg0, %c0_i32, %c0_i32_0 : i32, i32, i32
  }
  func.func @transform_2(%arg0: i32) -> (i32, i32, i32) {
    %c0_i32 = arith.constant 0 : i32
    %c0_i32_0 = arith.constant 0 : i32
    %c0_i32_1 = arith.constant 0 : i32
    return %arg0, %c0_i32, %c0_i32_0 : i32, i32, i32
  }
  func.func @transform_3(%arg0: i32) -> (i32, i32, i32) {
    %c0_i32 = arith.constant 0 : i32
    %c0_i32_0 = arith.constant 0 : i32
    %c0_i32_1 = arith.constant 0 : i32
    return %arg0, %c0_i32, %c0_i32_0 : i32, i32, i32
  }
  func.func @transform_4(%arg0: i32) -> (i32, i32) {
    %c0_i32 = arith.constant 0 : i32
    %c0_i32_0 = arith.constant 0 : i32
    %c0_i32_1 = arith.constant 0 : i32
    return %c0_i32, %c0_i32_0 : i32, i32
  }
  func.func @transform_5(%arg0: i32) -> (i32, i32, i32) {
    %c0_i32 = arith.constant 0 : i32
    %c0_i32_0 = arith.constant 0 : i32
    %c0_i32_1 = arith.constant 0 : i32
    return %arg0, %c0_i32, %c0_i32_0 : i32, i32, i32
  }
}

</mosaic_0001>

<llo_original>
// kernel: tpu_custom_call.1
$region0: #{tpu_custom_call.1}
  #allocation0 [shape = 'u32[]', space=smem, size = 0x4, offset = 0x4, fixed_abs, tag = 'smem constant byte address 0x4 - core index']
  #allocation1 [shape = 'u32[144,128]{1,0:T(1,128)}', space=vmem, size = 0x12000, scoped, tag = 'internal scratch']
  %s0 = inlined_call_operand.hbm [shape: f32[4,2,64], index: 0, kind: input, shape index: {}]
  %s1 = inlined_call_operand.hbm [shape: f32[4,64,256], index: 1, kind: input, shape index: {}]
  %s2 = inlined_call_operand.hbm [shape: f32[4,1,256], index: 2, kind: input, shape index: {}]
  %s3 = inlined_call_operand.vmem [shape: f32[4,1,256], index: 3, kind: input, shape index: {}]
  %s4 = inlined_call_operand.hbm [shape: f32[256,256], index: 4, kind: input, shape index: {}]
  %s5 = inlined_call_operand.hbm [shape: f32[4,2,256], index: 5, kind: output, shape index: {}]
  %s6 = sld [smem:[#allocation0]]
  $region69: #{tpu_custom_call.1} parent=0
    _
  %s8 = ssub.s32 1, %s6
  %s9 = scalar_select 0, %s8, %s6
  $region1: #{tpu_custom_call.1} parent=0
    #allocation2 [shape = 'u8[4096]{0}', space=vmem, size = 0x1000, scoped, tag = 'input window, operand 0']
    #allocation3 [shape = 's32[2]{0}', space=sflag, size = 0x8, scoped, tag = 'scoped memory for tpu_custom_call.1']
    #allocation4 [shape = 's32[2]{0}', space=sflag, size = 0x8, scoped, tag = 'scoped memory for tpu_custom_call.1']
    #allocation5 [shape = 'u8[262144]{0}', space=vmem, size = 0x40000, scoped, tag = 'input window, operand 1']
    #allocation6 [shape = 's32[2]{0}', space=sflag, size = 0x8, scoped, tag = 'scoped memory for tpu_custom_call.1']
    #allocation7 [shape = 'u8[4096]{0}', space=vmem, size = 0x1000, scoped, tag = 'input window, operand 2']
    #allocation8 [shape = 'u8[262144]{0}', space=vmem, size = 0x40000, scoped, tag = 'input window, operand 4, single buffered']
    #allocation9 [shape = 's32[1]{0}', space=sflag, size = 0x4, scoped, tag = 'scoped memory for tpu_custom_call.1']
    #allocation10 [shape = 'u8[8192]{0}', space=vmem, size = 0x2000, scoped, tag = 'output window, operand 0']
    %10 = vsyncpa [#allocation3], 0
    %s11 = scalar_lea.sflag [#allocation3], 1
    %12 = vsyncpa %s11, 0
    %13 = vsyncpa [#allocation6], 0
    %s14 = scalar_lea.sflag [#allocation6], 1
    %15 = vsyncpa %s14, 0
    %16 = vsyncpa [#allocation9], 0
    %17 = vsyncpa [#allocation4], 0
    %s18 = scalar_lea.sflag [#allocation4], 1
    %19 = vsyncpa %s18, 0
    loop: start=0, step=1, limit=4
    $region2: #{tpu_custom_call.1} parent=1 // loop_pre_header
      _
    $region3: #{tpu_custom_call.1} parent=1 // loop_header
      %s21 = sphi 0, %s25
      %p22 = scmp.ge.s32.totalorder %s21, 4
      %s31 = sphi 0, %s33
      %s34 = sphi 0, %s31
      %s35 = sphi 0, %s34
      %s51 = sphi 0, %s35
      %s57 = sphi 0, %s59
      %s60 = sphi 0, %s57
      %s61 = sphi 0, %s60
      %s77 = sphi 0, %s61
      %s83 = sphi 0, %s85
      %s86 = sphi 0, %s83
      %s87 = sphi 0, %s86
      %s103 = sphi 0, %s87
      %s109 = sphi 0, %s111
      %s112 = sphi 0, %s109
      %s113 = sphi 0, %s112
      %s129 = sphi 0, %s113
      %s133 = sphi 0, %s133
      %s135 = sphi 0, %s133
      %s136 = sphi 0, %s135
      %s150 = sphi 0, %s136
      %s156 = sphi 0, %s158
      %s159 = sphi 0, %s156
      %s160 = sphi 0, %s159
      %s176 = sphi 0, %s160
    $region4: #{tpu_custom_call.1} parent=1 // loop_header_branch
      %24 = sbr.rel (%p22) target = $region8
    $region5: #{tpu_custom_call.1} parent=1 // loop_body
      %s26 = ssub.s32 %s21, 1
      %s27 = ssub.s32 %s21, 2
      %s28 = sadd.s32 %s21, 1
      %s29 = ssub.s32 %s21, %s28
      %p30 = scmp.eq.s32.totalorder %s29, 0
      %s32 = sadd.s32 %s31, 1
      %s33 = scalar_select %p30, %s31, %s32
      %p36 = pneg %p30
      %p37 = scmp.eq.s32.totalorder %s21, 1
      %p38 = por %p36, %p37
      %p39 = scmp.ne.s32.totalorder %s31, %s34
      %p40 = scmp.eq.s32.totalorder %s21, 0
      %p41 = por %p39, %p40
      %p42 = scmp.ne.s32.totalorder %s31, %s34
      %p43 = scmp.eq.s32.totalorder %s26, 1
      %p44 = por %p42, %p43
      %p45 = scmp.ne.s32.totalorder %s34, %s35
      %p46 = scmp.eq.s32.totalorder %s26, 0
      %p47 = por %p45, %p46
      %p48 = scmp.ne.s32.totalorder %s34, %s35
      %p49 = scmp.eq.s32.totalorder %s27, 1
      %p50 = por %p48, %p49
      %p52 = scmp.ne.s32.totalorder %s35, %s51
      %p53 = scmp.eq.s32.totalorder %s27, 0
      %p54 = por %p52, %p53
      %s55 = ssub.s32 %s21, %s28
      %p56 = scmp.eq.s32.totalorder %s55, 0
      %s58 = sadd.s32 %s57, 1
      %s59 = scalar_select %p56, %s57, %s58
      %p62 = pneg %p56
      %p63 = scmp.eq.s32.totalorder %s21, 1
      %p64 = por %p62, %p63
      %p65 = scmp.ne.s32.totalorder %s57, %s60
      %p66 = scmp.eq.s32.totalorder %s21, 0
      %p67 = por %p65, %p66
      %p68 = scmp.ne.s32.totalorder %s57, %s60
      %p69 = scmp.eq.s32.totalorder %s26, 1
      %p70 = por %p68, %p69
      %p71 = scmp.ne.s32.totalorder %s60, %s61
      %p72 = scmp.eq.s32.totalorder %s26, 0
      %p73 = por %p71, %p72
      %p74 = scmp.ne.s32.totalorder %s60, %s61
      %p75 = scmp.eq.s32.totalorder %s27, 1
      %p76 = por %p74, %p75
      %p78 = scmp.ne.s32.totalorder %s61, %s77
      %p79 = scmp.eq.s32.totalorder %s27, 0
      %p80 = por %p78, %p79
      %s81 = ssub.s32 %s21, %s28
      %p82 = scmp.eq.s32.totalorder %s81, 0
      %s84 = sadd.s32 %s83, 1
      %s85 = scalar_select %p82, %s83, %s84
      %p88 = pneg %p82
      %p89 = scmp.eq.s32.totalorder %s21, 1
      %p90 = por %p88, %p89
      %p91 = scmp.ne.s32.totalorder %s83, %s86
      %p92 = scmp.eq.s32.totalorder %s21, 0
      %p93 = por %p91, %p92
      %p94 = scmp.ne.s32.totalorder %s83, %s86
      %p95 = scmp.eq.s32.totalorder %s26, 1
      %p96 = por %p94, %p95
      %p97 = scmp.ne.s32.totalorder %s86, %s87
      %p98 = scmp.eq.s32.totalorder %s26, 0
      %p99 = por %p97, %p98
      %p100 = scmp.ne.s32.totalorder %s86, %s87
      %p101 = scmp.eq.s32.totalorder %s27, 1
      %p102 = por %p100, %p101
      %p104 = scmp.ne.s32.totalorder %s87, %s103
      %p105 = scmp.eq.s32.totalorder %s27, 0
      %p106 = por %p104, %p105
      %s107 = ssub.s32 %s21, %s28
      %p108 = scmp.eq.s32.totalorder %s107, 0
      %s110 = sadd.s32 %s109, 1
      %s111 = scalar_select %p108, %s109, %s110
      %p114 = pneg %p108
      %p115 = scmp.eq.s32.totalorder %s21, 1
      %p116 = por %p114, %p115
      %p117 = scmp.ne.s32.totalorder %s109, %s112
      %p118 = scmp.eq.s32.totalorder %s21, 0
      %p119 = por %p117, %p118
      %p120 = scmp.ne.s32.totalorder %s109, %s112
      %p121 = scmp.eq.s32.totalorder %s26, 1
      %p122 = por %p120, %p121
      %p123 = scmp.ne.s32.totalorder %s112, %s113
      %p124 = scmp.eq.s32.totalorder %s26, 0
      %p125 = por %p123, %p124
      %p126 = scmp.ne.s32.totalorder %s112, %s113
      %p127 = scmp.eq.s32.totalorder %s27, 1
      %p128 = por %p126, %p127
      %p130 = scmp.ne.s32.totalorder %s113, %s129
      %p131 = scmp.eq.s32.totalorder %s27, 0
      %p132 = por %p130, %p131
      %s134 = sadd.s32 %s133, 1
      %p137 = scmp.eq.s32.totalorder %s21, 1
      %p138 = scmp.ne.s32.totalorder %s133, %s135
      %p139 = scmp.eq.s32.totalorder %s21, 0
      %p140 = por %p138, %p139
      %p141 = scmp.ne.s32.totalorder %s133, %s135
      %p142 = scmp.eq.s32.totalorder %s26, 1
      %p143 = por %p141, %p142
      %p144 = scmp.ne.s32.totalorder %s135, %s136
      %p145 = scmp.eq.s32.totalorder %s26, 0
      %p146 = por %p144, %p145
      %p147 = scmp.ne.s32.totalorder %s135, %s136
      %p148 = scmp.eq.s32.totalorder %s27, 1
      %p149 = por %p147, %p148
      %p151 = scmp.ne.s32.totalorder %s136, %s150
      %p152 = scmp.eq.s32.totalorder %s27, 0
      %p153 = por %p151, %p152
      %s154 = ssub.s32 %s21, %s28
      %p155 = scmp.eq.s32.totalorder %s154, 0
      %s157 = sadd.s32 %s156, 1
      %s158 = scalar_select %p155, %s156, %s157
      %p161 = pneg %p155
      %p162 = scmp.eq.s32.totalorder %s21, 1
      %p163 = por %p161, %p162
      %p164 = scmp.ne.s32.totalorder %s156, %s159
      %p165 = scmp.eq.s32.totalorder %s21, 0
      %p166 = por %p164, %p165
      %p167 = scmp.ne.s32.totalorder %s156, %s159
      %p168 = scmp.eq.s32.totalorder %s26, 1
      %p169 = por %p167, %p168
      %p170 = scmp.ne.s32.totalorder %s159, %s160
      %p171 = scmp.eq.s32.totalorder %s26, 0
      %p172 = por %p170, %p171
      %p173 = scmp.ne.s32.totalorder %s159, %s160
      %p174 = scmp.eq.s32.totalorder %s27, 1
      %p175 = por %p173, %p174
      %p177 = scmp.ne.s32.totalorder %s160, %s176
      %p178 = scmp.eq.s32.totalorder %s27, 0
      %p179 = por %p177, %p178
      %p180 = scmp.le.s32.totalorder 1, %s21
      %p181 = scmp.lt.s32.totalorder %s21, 3
      %p182 = pnand %p180, %p181
      %p183 = pneg %p182
      // Predicated region
      $region9: #{tpu_custom_call.1} parent=5 // pred_check
        _
      $region10: #{tpu_custom_call.1} parent=5 // pred_check_branch
        %185 = sbr.rel (%p182) target = $region12
      $region11: #{tpu_custom_call.1} parent=5 // pred_region
        %s186 = ssub.s32 %s21, 1
        // Predicated region
        $region13: #{tpu_custom_call.1} parent=11 // pred_check
          %p187 = pneg %p146
        $region14: #{tpu_custom_call.1} parent=11 // pred_check_branch
          %189 = sbr.rel (%p187) target = $region16
        $region15: #{tpu_custom_call.1} parent=11 // pred_region
          %s191 = ssub.s32 8192, 8192
          %192 = vsyncadd [#allocation9], %s191
          %s193 = sshll.u32 [#allocation8], 4
          %s194 = int_to_ptr.vmem [resolvable:$true] %s193
          %199 = dma.hbm_to_vmem [thread:$0]  %s4, 8192, %s194, [#allocation9], 256, 256, 16
        $region16: #{tpu_custom_call.1} parent=11 // pred_fallthru
          _
      $region12: #{tpu_custom_call.1} parent=5 // pred_fallthru
        _
      %p200 = scmp.lt.s32.totalorder %s21, 2
      // Predicated region
      $region17: #{tpu_custom_call.1} parent=5 // pred_check
        %p201 = pneg %p200
      $region18: #{tpu_custom_call.1} parent=5 // pred_check_branch
        %203 = sbr.rel (%p201) target = $region20
      $region19: #{tpu_custom_call.1} parent=5 // pred_region
        // Predicated region
        $region21: #{tpu_custom_call.1} parent=19 // pred_check
          %p204 = pneg %p41
        $region22: #{tpu_custom_call.1} parent=19 // pred_check_branch
          %206 = sbr.rel (%p204) target = $region24
        $region23: #{tpu_custom_call.1} parent=19 // pred_region
          %s207 = sand.u32 %s31, 1
          %s208 = scalar_lea.sflag [#allocation3], %s207
          %s209 = sand.u32 %s31, 1
          %s210 = smul.addr %s209, 4
          %s211 = scalar_lea.vmem [#allocation2], %s210
          %s212 = smul.u32 2, %s21
          %s214 = ssub.s32 64, 64
          %215 = vsyncadd %s208, %s214
          %s216 = smul.addr %s212, 32
          %s217 = scalar_lea.hbm %s0, %s216
          %s218 = sshll.u32 %s211, 4
          %s219 = int_to_ptr.vmem [resolvable:$true] %s218
          %224 = dma.hbm_to_vmem [thread:$0]  %s217, 64, %s219, %s208, 32, 32, 2
        $region24: #{tpu_custom_call.1} parent=19 // pred_fallthru
          _
        // Predicated region
        $region25: #{tpu_custom_call.1} parent=19 // pred_check
          %p225 = pneg %p67
        $region26: #{tpu_custom_call.1} parent=19 // pred_check_branch
          %227 = sbr.rel (%p225) target = $region28
        $region27: #{tpu_custom_call.1} parent=19 // pred_region
          %s228 = sand.u32 %s21, 1
          %s229 = scalar_lea.sflag [#allocation6], %s228
          %s230 = sand.u32 %s57, 1
          %s231 = smul.addr %s230, 256
          %s232 = scalar_lea.vmem [#allocation5], %s231
          %s233 = smul.u32 2, %s21
          %s235 = ssub.s32 4096, 4096
          %236 = vsyncadd %s229, %s235
          %s237 = smul.addr %s233, 16
          %s238 = smul.addr %s237, 128
          %s239 = scalar_lea.hbm %s1, %s238
          %s240 = sshll.u32 %s232, 4
          %s241 = int_to_ptr.vmem [resolvable:$true] %s240
          %246 = dma.hbm_to_vmem [thread:$0]  %s239, 4096, %s241, %s229, 256, 256, 16
        $region28: #{tpu_custom_call.1} parent=19 // pred_fallthru
          _
        // Predicated region
        $region29: #{tpu_custom_call.1} parent=19 // pred_check
          %p247 = pneg %p93
        $region30: #{tpu_custom_call.1} parent=19 // pred_check_branch
          %249 = sbr.rel (%p247) target = $region32
        $region31: #{tpu_custom_call.1} parent=19 // pred_region
          %s250 = sand.u32 %s21, 1
          %s251 = scalar_lea.sflag [#allocation6], %s250
          %s252 = sand.u32 %s83, 1
          %s253 = smul.addr %s252, 4
          %s254 = scalar_lea.vmem [#allocation7], %s253
          %s255 = smul.u32 2, %s21
          %s257 = ssub.s32 64, 64
          %258 = vsyncadd %s251, %s257
          %s259 = smul.addr %s255, 2
          %s260 = smul.addr %s259, 16
          %s261 = scalar_lea.hbm %s2, %s260
          %s262 = sshll.u32 %s254, 4
          %s263 = int_to_ptr.vmem [resolvable:$true] %s262
          %268 = dma.hbm_to_vmem [thread:$0]  %s261, 64, %s263, %s251, 32, 32, 2
        $region32: #{tpu_custom_call.1} parent=19 // pred_fallthru
          _
        // Predicated region
        $region33: #{tpu_custom_call.1} parent=19 // pred_check
          %p269 = pneg %p119
        $region34: #{tpu_custom_call.1} parent=19 // pred_check_branch
          %271 = sbr.rel (%p269) target = $region36
        $region35: #{tpu_custom_call.1} parent=19 // pred_region
          %s272 = smul.u32 2, %s21
          %p273 = scmp.lt.s32.totalorder %s272, 3
          %s274 = scalar_select %p273, %s272, 3
          %s275 = smul.addr %s274, 2
          %s276 = scalar_lea.vmem %s3, %s275
          %s277 = smul.u32 2, %s21
        $region36: #{tpu_custom_call.1} parent=19 // pred_fallthru
          _
      $region20: #{tpu_custom_call.1} parent=5 // pred_fallthru
        _
      %p278 = scmp.le.s32.totalorder 1, %s21
      %p279 = scmp.lt.s32.totalorder %s21, 3
      %p280 = pnand %p278, %p279
      %p281 = pneg %p280
      // Predicated region
      $region37: #{tpu_custom_call.1} parent=5 // pred_check
        _
      $region38: #{tpu_custom_call.1} parent=5 // pred_check_branch
        %283 = sbr.rel (%p280) target = $region40
      $region39: #{tpu_custom_call.1} parent=5 // pred_region
        %s284 = ssub.s32 %s21, 1
        %s285 = sand.u32 %s34, 1
        %s286 = scalar_lea.sflag [#allocation3], %s285
        %s287 = sand.u32 %s34, 1
        %s288 = smul.addr %s287, 4
        %s289 = scalar_lea.vmem [#allocation2], %s288
        // Predicated region
        $region41: #{tpu_custom_call.1} parent=39 // pred_check
          %p290 = pneg %p47
        $region42: #{tpu_custom_call.1} parent=39 // pred_check_branch
          %292 = sbr.rel (%p290) target = $region44
        $region43: #{tpu_custom_call.1} parent=39 // pred_region
          %293 = dma.done %s286, 64
        $region44: #{tpu_custom_call.1} parent=39 // pred_fallthru
          _
        %s294 = sand.u32 %s26, 1
        %s295 = scalar_lea.sflag [#allocation6], %s294
        %s296 = sand.u32 %s60, 1
        %s297 = smul.addr %s296, 256
        %s298 = scalar_lea.vmem [#allocation5], %s297
        // Predicated region
        $region45: #{tpu_custom_call.1} parent=39 // pred_check
          %p299 = pneg %p73
        $region46: #{tpu_custom_call.1} parent=39 // pred_check_branch
          %301 = sbr.rel (%p299) target = $region48
        $region47: #{tpu_custom_call.1} parent=39 // pred_region
          %302 = dma.done %s295, 4096
        $region48: #{tpu_custom_call.1} parent=39 // pred_fallthru
          _
        %s303 = sand.u32 %s26, 1
        %s304 = scalar_lea.sflag [#allocation6], %s303
        %s305 = sand.u32 %s86, 1
        %s306 = smul.addr %s305, 4
        %s307 = scalar_lea.vmem [#allocation7], %s306
        // Predicated region
        $region49: #{tpu_custom_call.1} parent=39 // pred_check
          %p308 = pneg %p99
        $region50: #{tpu_custom_call.1} parent=39 // pred_check_branch
          %310 = sbr.rel (%p308) target = $region52
        $region51: #{tpu_custom_call.1} parent=39 // pred_region
          %311 = dma.done %s304, 64
        $region52: #{tpu_custom_call.1} parent=39 // pred_fallthru
          _
        // Predicated region
        $region53: #{tpu_custom_call.1} parent=39 // pred_check
          %p312 = pneg %p146
        $region54: #{tpu_custom_call.1} parent=39 // pred_check_branch
          %314 = sbr.rel (%p312) target = $region56
        $region55: #{tpu_custom_call.1} parent=39 // pred_region
          %315 = dma.done [#allocation9], 8192
        $region56: #{tpu_custom_call.1} parent=39 // pred_fallthru
          _
        %s316 = sand.u32 %s34, 1
        %s317 = scalar_lea.sflag [#allocation3], %s316
        %s318 = sand.u32 %s34, 1
        %s319 = smul.addr %s318, 4
        %s320 = scalar_lea.vmem [#allocation2], %s319
        %p321 = pneg %p47
        %p322 = pneg %p44
        %s323 = sand.u32 %s26, 1
        %s324 = scalar_lea.sflag [#allocation6], %s323
        %s325 = sand.u32 %s60, 1
        %s326 = smul.addr %s325, 256
        %s327 = scalar_lea.vmem [#allocation5], %s326
        %p328 = pneg %p73
        %p329 = pneg %p70
        %s330 = sand.u32 %s26, 1
        %s331 = scalar_lea.sflag [#allocation6], %s330
        %s332 = sand.u32 %s86, 1
        %s333 = smul.addr %s332, 4
        %s334 = scalar_lea.vmem [#allocation7], %s333
        %p335 = pneg %p99
        %p336 = pneg %p96
        %s337 = smul.u32 2, %s26
        %p338 = scmp.lt.s32.totalorder %s337, 3
        %s339 = scalar_select %p338, %s337, 3
        %s340 = smul.addr %s339, 2
        %s341 = scalar_lea.vmem %s3, %s340
        %p342 = pneg %p125
        %p343 = pneg %p122
        %p344 = pneg %p146
        %p345 = pneg %p143
        %p346 = pneg %p172
        %p347 = pneg %p169
        %s348 = sand.u32 %s159, 1
        %s349 = scalar_lea.sflag [#allocation4], %s348
        %s350 = sand.u32 %s159, 1
        %s351 = smul.addr %s350, 8
        %s352 = scalar_lea.vmem [#allocation10], %s351
        %s353 = smul.u32 2, %s26
        %s354 = smul.u32 2, %s26
        %s355 = smul.u32 2, %s26
        %s356 = smul.u32 2, %s26
        %p357 = scmp.lt.s32.totalorder %s356, 3
        %s358 = scalar_select %p357, %s356, 3
        %s359 = smul.addr %s358, 2
        %s360 = scalar_lea.vmem %s3, %s359
        %s361 = smul.u32 2, %s26
        %s362 = smul.u32 2, %s26
        %v363 = vld [vmem:[%s289] sm:$0x3]
        %v364 = vld [vmem:[%s298] sm:$0xff]
        %v365 = vld [vmem:[%s298 + $0x8] sm:$0xff]
        %v366 = vld [vmem:[%s298 + $0x10] sm:$0xff]
        %v367 = vld [vmem:[%s298 + $0x18] sm:$0xff]
        %v368 = vld [vmem:[%s298 + $0x20] sm:$0xff]
        %v369 = vld [vmem:[%s298 + $0x28] sm:$0xff]
        %v370 = vld [vmem:[%s298 + $0x30] sm:$0xff]
        %v371 = vld [vmem:[%s298 + $0x38] sm:$0xff]
        %v372 = vld [vmem:[%s298 + $0x40] sm:$0xff]
        %v373 = vld [vmem:[%s298 + $0x48] sm:$0xff]
        %v374 = vld [vmem:[%s298 + $0x50] sm:$0xff]
        %v375 = vld [vmem:[%s298 + $0x58] sm:$0xff]
        %v376 = vld [vmem:[%s298 + $0x60] sm:$0xff]
        %v377 = vld [vmem:[%s298 + $0x68] sm:$0xff]
        %v378 = vld [vmem:[%s298 + $0x70] sm:$0xff]
        %v379 = vld [vmem:[%s298 + $0x78] sm:$0xff]
        %vm380 = vcmask 523264
        %v382 = vsel %vm380, %v363, 0
        %384 = vmatprep.subr.mxu0 %v365
        %385 = vmatpush1.msra.mxu0 %v364
        %386 = vmatprep.subr.mxu0 %v367
        %387 = vmatpush1.msra.mxu0 %v366
        %388 = vmatprep.subr.mxu0 %v369
        %389 = vmatpush1.msra.mxu0 %v368
        %390 = vmatprep.subr.mxu0 %v371
        %391 = vmatpush1.msra.mxu0 %v370
        %392 = vmatprep.subr.mxu0 %v373
        %393 = vmatpush1.msra.mxu0 %v372
        %394 = vmatprep.subr.mxu0 %v375
        %395 = vmatpush1.msra.mxu0 %v374
        %396 = vmatprep.subr.mxu0 %v377
        %397 = vmatpush1.msra.mxu0 %v376
        %398 = vmatprep.subr.mxu0 %v379
        %399 = vmatpush1.msra.mxu0 %v378
        %400 = vmatprep.subr.mxu0 0.0
        %401 = vmatpush1.msra.mxu0 0.0
        %402 = vmatprep.subr.mxu0 0.0
        %403 = vmatpush1.msra.mxu0 0.0
        %404 = vmatprep.subr.mxu0 0.0
        %405 = vmatpush1.msra.mxu0 0.0
        %406 = vmatprep.subr.mxu0 0.0
        %407 = vmatpush1.msra.mxu0 0.0
        %408 = vmatprep.subr.mxu0 0.0
        %409 = vmatpush1.msra.mxu0 0.0
        %410 = vmatprep.subr.mxu0 0.0
        %411 = vmatpush1.msra.mxu0 0.0
        %412 = vmatprep.subr.mxu0 0.0
        %413 = vmatpush1.msra.mxu0 0.0
        %414 = vmatprep.subr.mxu0 0.0
        %415 = vmatpush1.msra.mxu0 0.0
        %416 = vmatprep.subr.mxu0 0.0
        %417 = vmatpush1.msra.mxu0 0.0
        %418 = vmatprep.subr.mxu0 0.0
        %419 = vmatpush1.msra.mxu0 0.0
        %420 = vmatprep.subr.mxu0 0.0
        %421 = vmatpush1.msra.mxu0 0.0
        %422 = vmatprep.subr.mxu0 0.0
        %423 = vmatpush1.msra.mxu0 0.0
        %424 = vmatprep.subr.mxu0 0.0
        %425 = vmatpush1.msra.mxu0 0.0
        %426 = vmatprep.subr.mxu0 0.0
        %427 = vmatpush1.msra.mxu0 0.0
        %428 = vmatprep.subr.mxu0 0.0
        %429 = vmatpush1.msra.mxu0 0.0
        %430 = vmatprep.subr.mxu0 0.0
        %431 = vmatpush1.msra.mxu0 0.0
        %432 = vmatprep.subr.mxu0 0.0
        %433 = vmatpush1.msra.mxu0 0.0
        %434 = vmatprep.subr.mxu0 0.0
        %435 = vmatpush1.msra.mxu0 0.0
        %436 = vmatprep.subr.mxu0 0.0
        %437 = vmatpush1.msra.mxu0 0.0
        %438 = vmatprep.subr.mxu0 0.0
        %439 = vmatpush1.msra.mxu0 0.0
        %440 = vmatprep.subr.mxu0 0.0
        %441 = vmatpush1.msra.mxu0 0.0
        %442 = vmatprep.subr.mxu0 0.0
        %443 = vmatpush1.msra.mxu0 0.0
        %444 = vmatprep.subr.mxu0 0.0
        %445 = vmatpush1.msra.mxu0 0.0
        %446 = vmatprep.subr.mxu0 0.0
        %447 = vmatpush1.msra.mxu0 0.0
        %448 = vmatprep.mubr.f32.mxu0 0.0
        %449 = vmatmul.mubr.f32.gmra.mrb[0].mxu0 %v382
        %v450 = vpop.f32.mrb[0].mxu0
        %v451 = vadd.f32 0.0, %v450
        %v452 = vpop.f32.mrb[0].mxu0
        %v453 = vadd.f32 0.0, %v452
        %454 = vdwg.mxu0
        %vm455 = vcmask 1041408
        %v456 = vsel %vm455, %v451, 0.0
        %v457 = vrot.slane %v456, 4
        %v458 = vadd.f32 %v456, %v457
        %v459 = vrot.slane %v458, 2
        %v460 = vadd.f32 %v458, %v459
        %v461 = vrot.slane %v460, 1
        %v462 = vadd.f32 %v460, %v461
        %v463 = vsel %vm455, %v453, 0.0
        %v464 = vrot.slane %v463, 4
        %v465 = vadd.f32 %v463, %v464
        %v466 = vrot.slane %v465, 2
        %v467 = vadd.f32 %v465, %v466
        %v468 = vrot.slane %v467, 1
        %v469 = vadd.f32 %v467, %v468
        %v470 = vmul.f32 %v462, 0.5
        %v471 = vmul.f32 %v469, 0.5
        %v472 = vmul.f32 %v451, %v451
        %v473 = vmul.f32 %v453, %v453
        %v474 = vsel %vm455, %v472, 0.0
        %v475 = vrot.slane %v474, 4
        %v476 = vadd.f32 %v474, %v475
        %v477 = vrot.slane %v476, 2
        %v478 = vadd.f32 %v476, %v477
        %v479 = vrot.slane %v478, 1
        %v480 = vadd.f32 %v478, %v479
        %v481 = vsel %vm455, %v473, 0.0
        %v482 = vrot.slane %v481, 4
        %v483 = vadd.f32 %v481, %v482
        %v484 = vrot.slane %v483, 2
        %v485 = vadd.f32 %v483, %v484
        %v486 = vrot.slane %v485, 1
        %v487 = vadd.f32 %v485, %v486
        %v488 = vmul.f32 %v480, 0.5
        %v489 = vmul.f32 %v487, 0.5
        %v490 = vld [vmem:[#allocation8] sm:$0xff]
        %v491 = vld [vmem:[#allocation8 + $0x8] sm:$0xff]
        %v492 = vld [vmem:[#allocation8 + $0x10] sm:$0xff]
        %v493 = vld [vmem:[#allocation8 + $0x18] sm:$0xff]
        %v494 = vld [vmem:[#allocation8 + $0x20] sm:$0xff]
        %v495 = vld [vmem:[#allocation8 + $0x28] sm:$0xff]
        %v496 = vld [vmem:[#allocation8 + $0x30] sm:$0xff]
        %v497 = vld [vmem:[#allocation8 + $0x38] sm:$0xff]
        %v498 = vld [vmem:[#allocation8 + $0x40] sm:$0xff]
        %v499 = vld [vmem:[#allocation8 + $0x48] sm:$0xff]
        %v500 = vld [vmem:[#allocation8 + $0x50] sm:$0xff]
        %v501 = vld [vmem:[#allocation8 + $0x58] sm:$0xff]
        %v502 = vld [vmem:[#allocation8 + $0x60] sm:$0xff]
        %v503 = vld [vmem:[#allocation8 + $0x68] sm:$0xff]
        %v504 = vld [vmem:[#allocation8 + $0x70] sm:$0xff]
        %v505 = vld [vmem:[#allocation8 + $0x78] sm:$0xff]
        %v506 = vld [vmem:[#allocation8 + $0x80] sm:$0xff]
        %v507 = vld [vmem:[#allocation8 + $0x88] sm:$0xff]
        %v508 = vld [vmem:[#allocation8 + $0x90] sm:$0xff]
        %v509 = vld [vmem:[#allocation8 + $0x98] sm:$0xff]
        %v510 = vld [vmem:[#allocation8 + $0xa0] sm:$0xff]
        %v511 = vld [vmem:[#allocation8 + $0xa8] sm:$0xff]
        %v512 = vld [vmem:[#allocation8 + $0xb0] sm:$0xff]
        %v513 = vld [vmem:[#allocation8 + $0xb8] sm:$0xff]
        %v514 = vld [vmem:[#allocation8 + $0xc0] sm:$0xff]
        %v515 = vld [vmem:[#allocation8 + $0xc8] sm:$0xff]
        %v516 = vld [vmem:[#allocation8 + $0xd0] sm:$0xff]
        %v517 = vld [vmem:[#allocation8 + $0xd8] sm:$0xff]
        %v518 = vld [vmem:[#allocation8 + $0xe0] sm:$0xff]
        %v519 = vld [vmem:[#allocation8 + $0xe8] sm:$0xff]
        %v520 = vld [vmem:[#allocation8 + $0xf0] sm:$0xff]
        %v521 = vld [vmem:[#allocation8 + $0xf8] sm:$0xff]
        %v522 = vld [vmem:[#allocation8 + $0x100] sm:$0xff]
        %v523 = vld [vmem:[#allocation8 + $0x108] sm:$0xff]
        %v524 = vld [vmem:[#allocation8 + $0x110] sm:$0xff]
        %v525 = vld [vmem:[#allocation8 + $0x118] sm:$0xff]
        %v526 = vld [vmem:[#allocation8 + $0x120] sm:$0xff]
        %v527 = vld [vmem:[#allocation8 + $0x128] sm:$0xff]
        %v528 = vld [vmem:[#allocation8 + $0x130] sm:$0xff]
        %v529 = vld [vmem:[#allocation8 + $0x138] sm:$0xff]
        %v530 = vld [vmem:[#allocation8 + $0x140] sm:$0xff]
        %v531 = vld [vmem:[#allocation8 + $0x148] sm:$0xff]
        %v532 = vld [vmem:[#allocation8 + $0x150] sm:$0xff]
        %v533 = vld [vmem:[#allocation8 + $0x158] sm:$0xff]
        %v534 = vld [vmem:[#allocation8 + $0x160] sm:$0xff]
        %v535 = vld [vmem:[#allocation8 + $0x168] sm:$0xff]
        %v536 = vld [vmem:[#allocation8 + $0x170] sm:$0xff]
        %v537 = vld [vmem:[#allocation8 + $0x178] sm:$0xff]
        %v538 = vld [vmem:[#allocation8 + $0x180] sm:$0xff]
        %v539 = vld [vmem:[#allocation8 + $0x188] sm:$0xff]
        %v540 = vld [vmem:[#allocation8 + $0x190] sm:$0xff]
        %v541 = vld [vmem:[#allocation8 + $0x198] sm:$0xff]
        %v542 = vld [vmem:[#allocation8 + $0x1a0] sm:$0xff]
        %v543 = vld [vmem:[#allocation8 + $0x1a8] sm:$0xff]
        %v544 = vld [vmem:[#allocation8 + $0x1b0] sm:$0xff]
        %v545 = vld [vmem:[#allocation8 + $0x1b8] sm:$0xff]
        %v546 = vld [vmem:[#allocation8 + $0x1c0] sm:$0xff]
        %v547 = vld [vmem:[#allocation8 + $0x1c8] sm:$0xff]
        %v548 = vld [vmem:[#allocation8 + $0x1d0] sm:$0xff]
        %v549 = vld [vmem:[#allocation8 + $0x1d8] sm:$0xff]
        %v550 = vld [vmem:[#allocation8 + $0x1e0] sm:$0xff]
        %v551 = vld [vmem:[#allocation8 + $0x1e8] sm:$0xff]
        %v552 = vld [vmem:[#allocation8 + $0x1f0] sm:$0xff]
        %v553 = vld [vmem:[#allocation8 + $0x1f8] sm:$0xff]
        %554 = vmatprep.subr.mxu0 %v491
        %555 = vmatpush1.msra.mxu0 %v490
        %556 = vmatprep.subr.mxu0 %v493
        %557 = vmatpush1.msra.mxu0 %v492
        %558 = vmatprep.subr.mxu0 %v495
        %559 = vmatpush1.msra.mxu0 %v494
        %560 = vmatprep.subr.mxu0 %v497
        %561 = vmatpush1.msra.mxu0 %v496
        %562 = vmatprep.subr.mxu0 %v499
        %563 = vmatpush1.msra.mxu0 %v498
        %564 = vmatprep.subr.mxu0 %v501
        %565 = vmatpush1.msra.mxu0 %v500
        %566 = vmatprep.subr.mxu0 %v503
        %567 = vmatpush1.msra.mxu0 %v502
        %568 = vmatprep.subr.mxu0 %v505
        %569 = vmatpush1.msra.mxu0 %v504
        %570 = vmatprep.subr.mxu0 %v507
        %571 = vmatpush1.msra.mxu0 %v506
        %572 = vmatprep.subr.mxu0 %v509
        %573 = vmatpush1.msra.mxu0 %v508
        %574 = vmatprep.subr.mxu0 %v511
        %575 = vmatpush1.msra.mxu0 %v510
        %576 = vmatprep.subr.mxu0 %v513
        %577 = vmatpush1.msra.mxu0 %v512
        %578 = vmatprep.subr.mxu0 %v515
        %579 = vmatpush1.msra.mxu0 %v514
        %580 = vmatprep.subr.mxu0 %v517
        %581 = vmatpush1.msra.mxu0 %v516
        %582 = vmatprep.subr.mxu0 %v519
        %583 = vmatpush1.msra.mxu0 %v518
        %584 = vmatprep.subr.mxu0 %v521
        %585 = vmatpush1.msra.mxu0 %v520
        %586 = vmatprep.subr.mxu0 %v523
        %587 = vmatpush1.msra.mxu0 %v522
        %588 = vmatprep.subr.mxu0 %v525
        %589 = vmatpush1.msra.mxu0 %v524
        %590 = vmatprep.subr.mxu0 %v527
        %591 = vmatpush1.msra.mxu0 %v526
        %592 = vmatprep.subr.mxu0 %v529
        %593 = vmatpush1.msra.mxu0 %v528
        %594 = vmatprep.subr.mxu0 %v531
        %595 = vmatpush1.msra.mxu0 %v530
        %596 = vmatprep.subr.mxu0 %v533
        %597 = vmatpush1.msra.mxu0 %v532
        %598 = vmatprep.subr.mxu0 %v535
        %599 = vmatpush1.msra.mxu0 %v534
        %600 = vmatprep.subr.mxu0 %v537
        %601 = vmatpush1.msra.mxu0 %v536
        %602 = vmatprep.subr.mxu0 %v539
        %603 = vmatpush1.msra.mxu0 %v538
        %604 = vmatprep.subr.mxu0 %v541
        %605 = vmatpush1.msra.mxu0 %v540
        %606 = vmatprep.subr.mxu0 %v543
        %607 = vmatpush1.msra.mxu0 %v542
        %608 = vmatprep.subr.mxu0 %v545
        %609 = vmatpush1.msra.mxu0 %v544
        %610 = vmatprep.subr.mxu0 %v547
        %611 = vmatpush1.msra.mxu0 %v546
        %612 = vmatprep.subr.mxu0 %v549
        %613 = vmatpush1.msra.mxu0 %v548
        %614 = vmatprep.subr.mxu0 %v551
        %615 = vmatpush1.msra.mxu0 %v550
        %616 = vmatprep.subr.mxu0 %v553
        %617 = vmatpush1.msra.mxu0 %v552
        %618 = vmatprep.mubr.f32.mxu0 %v471
        %619 = vmatmul.mubr.f32.gmra.mrb[0].mxu0 %v470
        %v620 = vpop.f32.mrb[0].mxu0
        %v621 = vadd.f32 0.0, %v620
        %v622 = vpop.f32.mrb[0].mxu0
        %v623 = vadd.f32 0.0, %v622
        %624 = vdwg.mxu0
        %625 = vmatprep.subr.mxu0 %v491
        %626 = vmatpush1.msra.mxu0 %v490
        %627 = vmatprep.subr.mxu0 %v493
        %628 = vmatpush1.msra.mxu0 %v492
        %629 = vmatprep.subr.mxu0 %v495
        %630 = vmatpush1.msra.mxu0 %v494
        %631 = vmatprep.subr.mxu0 %v497
        %632 = vmatpush1.msra.mxu0 %v496
        %633 = vmatprep.subr.mxu0 %v499
        %634 = vmatpush1.msra.mxu0 %v498
        %635 = vmatprep.subr.mxu0 %v501
        %636 = vmatpush1.msra.mxu0 %v500
        %637 = vmatprep.subr.mxu0 %v503
        %638 = vmatpush1.msra.mxu0 %v502
        %639 = vmatprep.subr.mxu0 %v505
        %640 = vmatpush1.msra.mxu0 %v504
        %641 = vmatprep.subr.mxu0 %v507
        %642 = vmatpush1.msra.mxu0 %v506
        %643 = vmatprep.subr.mxu0 %v509
        %644 = vmatpush1.msra.mxu0 %v508
        %645 = vmatprep.subr.mxu0 %v511
        %646 = vmatpush1.msra.mxu0 %v510
        %647 = vmatprep.subr.mxu0 %v513
        %648 = vmatpush1.msra.mxu0 %v512
        %649 = vmatprep.subr.mxu0 %v515
        %650 = vmatpush1.msra.mxu0 %v514
        %651 = vmatprep.subr.mxu0 %v517
        %652 = vmatpush1.msra.mxu0 %v516
        %653 = vmatprep.subr.mxu0 %v519
        %654 = vmatpush1.msra.mxu0 %v518
        %655 = vmatprep.subr.mxu0 %v521
        %656 = vmatpush1.msra.mxu0 %v520
        %657 = vmatprep.subr.mxu0 %v523
        %658 = vmatpush1.msra.mxu0 %v522
        %659 = vmatprep.subr.mxu0 %v525
        %660 = vmatpush1.msra.mxu0 %v524
        %661 = vmatprep.subr.mxu0 %v527
        %662 = vmatpush1.msra.mxu0 %v526
        %663 = vmatprep.subr.mxu0 %v529
        %664 = vmatpush1.msra.mxu0 %v528
        %665 = vmatprep.subr.mxu0 %v531
        %666 = vmatpush1.msra.mxu0 %v530
        %667 = vmatprep.subr.mxu0 %v533
        %668 = vmatpush1.msra.mxu0 %v532
        %669 = vmatprep.subr.mxu0 %v535
        %670 = vmatpush1.msra.mxu0 %v534
        %671 = vmatprep.subr.mxu0 %v537
        %672 = vmatpush1.msra.mxu0 %v536
        %673 = vmatprep.subr.mxu0 %v539
        %674 = vmatpush1.msra.mxu0 %v538
        %675 = vmatprep.subr.mxu0 %v541
        %676 = vmatpush1.msra.mxu0 %v540
        %677 = vmatprep.subr.mxu0 %v543
        %678 = vmatpush1.msra.mxu0 %v542
        %679 = vmatprep.subr.mxu0 %v545
        %680 = vmatpush1.msra.mxu0 %v544
        %681 = vmatprep.subr.mxu0 %v547
        %682 = vmatpush1.msra.mxu0 %v546
        %683 = vmatprep.subr.mxu0 %v549
        %684 = vmatpush1.msra.mxu0 %v548
        %685 = vmatprep.subr.mxu0 %v551
        %686 = vmatpush1.msra.mxu0 %v550
        %687 = vmatprep.subr.mxu0 %v553
        %688 = vmatpush1.msra.mxu0 %v552
        %689 = vmatprep.mubr.f32.mxu0 %v489
        %690 = vmatmul.mubr.f32.gmra.mrb[0].mxu0 %v488
        %v691 = vpop.f32.mrb[0].mxu0
        %v692 = vadd.f32 0.0, %v691
        %v693 = vpop.f32.mrb[0].mxu0
        %v694 = vadd.f32 0.0, %v693
        %695 = vdwg.mxu0
        %v696 = vmul.f32 %v621, %v621
        %v697 = vmul.f32 %v623, %v623
        %v698 = vsub.f32 %v692, %v696
        %v699 = vsub.f32 %v694, %v697
        %v700 = vadd.f32 %v698, 1e-05
        %v701 = vadd.f32 %v699, 1e-05
        %v702 = vrsqrt.pop %v700
        %v703 = vrsqrt.pop %v701
        %v704 = vld [vmem:[%s307] sm:$0x3]
        %v706 = vlaneseq
        %v707 = vshrl.u32 %v706, 7
        %v708 = vsub.s32 0, %v707
        %v709 = vrot.slane %v704, %v708
        %v710 = vlaneseq
        %v711 = vshrl.u32 %v710, 7
        %v712 = vsub.s32 1, %v711
        %v713 = vrot.slane %v704, %v712
        %v716 = vmul.f32 %v702, %v709
        %v717 = vmul.f32 %v703, %v713
        %v718 = vld [vmem:[%s360] sm:$0x3]
        %v719 = vmul.f32 %v621, %v716
        %v720 = vmul.f32 %v623, %v717
        %v723 = vcombine.low %v719, %v720
        %v725 = vunpack.c.l.s4 1966171168
        %v726 = vunpack.c.0.s8 %v725
        %v727 = vlaneseq
        %v728 = vshrl.u32 %v727, 7
        %v729 = vsub.s32 %v726, %v728
        %v730 = vrot.slane %v723, %v729
        %v732 = vunpack.c.l.s4 1966171168
        %v733 = vunpack.c.0.s8 %v732
        %v734 = vlaneseq
        %v735 = vshrl.u32 %v734, 7
        %v736 = vsub.s32 %v733, %v735
        %v737 = vrot.slane %v730, %v736
        %v739 = vsub.f32 %v718, %v737
        %v740 = vlaneseq
        %v741 = vshrl.u32 %v740, 7
        %v742 = vsub.s32 0, %v741
        %v743 = vrot.slane %v716, %v742
        %v744 = vlaneseq
        %v745 = vshrl.u32 %v744, 7
        %v746 = vsub.s32 0, %v745
        %v747 = vrot.slane %v717, %v746
        %v748 = vmul.f32 %v451, %v743
        %v749 = vmul.f32 %v453, %v747
        %v751 = vlaneseq
        %v752 = vshrl.u32 %v751, 7
        %v753 = vsub.s32 0, %v752
        %v754 = vrot.slane %v739, %v753
        %v755 = vlaneseq
        %v756 = vshrl.u32 %v755, 7
        %v757 = vsub.s32 1, %v756
        %v758 = vrot.slane %v739, %v757
        %v761 = vadd.f32 %v748, %v754
        %v762 = vadd.f32 %v749, %v758
        %vm763 = vcmp.ge.f32.partialorder %v761, 0.0
        %vm764 = vcmp.ge.f32.partialorder %v762, 0.0
        %v765 = vmul.f32 %v761, 0.2
        %v766 = vmul.f32 %v762, 0.2
        %v767 = vsel %vm763, %v761, %v765
        %v768 = vsel %vm764, %v762, %v766
        %v771 = vcombine.low %v767, %v768
        %v773 = vunpack.c.l.s4 1983009808
        %v774 = vunpack.c.0.s8 %v773
        %v775 = vlaneseq
        %v776 = vshrl.u32 %v775, 7
        %v777 = vsub.s32 %v774, %v776
        %v778 = vrot.slane %v771, %v777
        %780 = vst [vmem:[%s352] sm:$0xf] %v778
        %s781 = scalar_lea.vmem %s289, 2 [#allocation2]
        %v782 = vld [vmem:[%s781] sm:$0x3]
        %s783 = scalar_lea.vmem %s298, 128 [#allocation5]
        %v784 = vld [vmem:[%s783] sm:$0xff]
        %v785 = vld [vmem:[%s783 + $0x8] sm:$0xff]
        %v786 = vld [vmem:[%s783 + $0x10] sm:$0xff]
        %v787 = vld [vmem:[%s783 + $0x18] sm:$0xff]
        %v788 = vld [vmem:[%s783 + $0x20] sm:$0xff]
        %v789 = vld [vmem:[%s783 + $0x28] sm:$0xff]
        %v790 = vld [vmem:[%s783 + $0x30] sm:$0xff]
        %v791 = vld [vmem:[%s783 + $0x38] sm:$0xff]
        %v792 = vld [vmem:[%s783 + $0x40] sm:$0xff]
        %v793 = vld [vmem:[%s783 + $0x48] sm:$0xff]
        %v794 = vld [vmem:[%s783 + $0x50] sm:$0xff]
        %v795 = vld [vmem:[%s783 + $0x58] sm:$0xff]
        %v796 = vld [vmem:[%s783 + $0x60] sm:$0xff]
        %v797 = vld [vmem:[%s783 + $0x68] sm:$0xff]
        %v798 = vld [vmem:[%s783 + $0x70] sm:$0xff]
        %v799 = vld [vmem:[%s783 + $0x78] sm:$0xff]
        %v801 = vsel %vm380, %v782, 0
        %803 = vmatprep.subr.mxu0 %v785
        %804 = vmatpush1.msra.mxu0 %v784
        %805 = vmatprep.subr.mxu0 %v787
        %806 = vmatpush1.msra.mxu0 %v786
        %807 = vmatprep.subr.mxu0 %v789
        %808 = vmatpush1.msra.mxu0 %v788
        %809 = vmatprep.subr.mxu0 %v791
        %810 = vmatpush1.msra.mxu0 %v790
        %811 = vmatprep.subr.mxu0 %v793
        %812 = vmatpush1.msra.mxu0 %v792
        %813 = vmatprep.subr.mxu0 %v795
        %814 = vmatpush1.msra.mxu0 %v794
        %815 = vmatprep.subr.mxu0 %v797
        %816 = vmatpush1.msra.mxu0 %v796
        %817 = vmatprep.subr.mxu0 %v799
        %818 = vmatpush1.msra.mxu0 %v798
        %819 = vmatprep.subr.mxu0 0.0
        %820 = vmatpush1.msra.mxu0 0.0
        %821 = vmatprep.subr.mxu0 0.0
        %822 = vmatpush1.msra.mxu0 0.0
        %823 = vmatprep.subr.mxu0 0.0
        %824 = vmatpush1.msra.mxu0 0.0
        %825 = vmatprep.subr.mxu0 0.0
        %826 = vmatpush1.msra.mxu0 0.0
        %827 = vmatprep.subr.mxu0 0.0
        %828 = vmatpush1.msra.mxu0 0.0
        %829 = vmatprep.subr.mxu0 0.0
        %830 = vmatpush1.msra.mxu0 0.0
        %831 = vmatprep.subr.mxu0 0.0
        %832 = vmatpush1.msra.mxu0 0.0
        %833 = vmatprep.subr.mxu0 0.0
        %834 = vmatpush1.msra.mxu0 0.0
        %835 = vmatprep.subr.mxu0 0.0
        %836 = vmatpush1.msra.mxu0 0.0
        %837 = vmatprep.subr.mxu0 0.0
        %838 = vmatpush1.msra.mxu0 0.0
        %839 = vmatprep.subr.mxu0 0.0
        %840 = vmatpush1.msra.mxu0 0.0
        %841 = vmatprep.subr.mxu0 0.0
        %842 = vmatpush1.msra.mxu0 0.0
        %843 = vmatprep.subr.mxu0 0.0
        %844 = vmatpush1.msra.mxu0 0.0
        %845 = vmatprep.subr.mxu0 0.0
        %846 = vmatpush1.msra.mxu0 0.0
        %847 = vmatprep.subr.mxu0 0.0
        %848 = vmatpush1.msra.mxu0 0.0
        %849 = vmatprep.subr.mxu0 0.0
        %850 = vmatpush1.msra.mxu0 0.0
        %851 = vmatprep.subr.mxu0 0.0
        %852 = vmatpush1.msra.mxu0 0.0
        %853 = vmatprep.subr.mxu0 0.0
        %854 = vmatpush1.msra.mxu0 0.0
        %855 = vmatprep.subr.mxu0 0.0
        %856 = vmatpush1.msra.mxu0 0.0
        %857 = vmatprep.subr.mxu0 0.0
        %858 = vmatpush1.msra.mxu0 0.0
        %859 = vmatprep.subr.mxu0 0.0
        %860 = vmatpush1.msra.mxu0 0.0
        %861 = vmatprep.subr.mxu0 0.0
        %862 = vmatpush1.msra.mxu0 0.0
        %863 = vmatprep.subr.mxu0 0.0
        %864 = vmatpush1.msra.mxu0 0.0
        %865 = vmatprep.subr.mxu0 0.0
        %866 = vmatpush1.msra.mxu0 0.0
        %867 = vmatprep.mubr.f32.mxu0 0.0
        %868 = vmatmul.mubr.f32.gmra.mrb[0].mxu0 %v801
        %v869 = vpop.f32.mrb[0].mxu0
        %v870 = vadd.f32 0.0, %v869
        %v871 = vpop.f32.mrb[0].mxu0
        %v872 = vadd.f32 0.0, %v871
        %873 = vdwg.mxu0
        %v874 = vsel %vm455, %v870, 0.0
        %v875 = vrot.slane %v874, 4
        %v876 = vadd.f32 %v874, %v875
        %v877 = vrot.slane %v876, 2
        %v878 = vadd.f32 %v876, %v877
        %v879 = vrot.slane %v878, 1
        %v880 = vadd.f32 %v878, %v879
        %v881 = vsel %vm455, %v872, 0.0
        %v882 = vrot.slane %v881, 4
        %v883 = vadd.f32 %v881, %v882
        %v884 = vrot.slane %v883, 2
        %v885 = vadd.f32 %v883, %v884
        %v886 = vrot.slane %v885, 1
        %v887 = vadd.f32 %v885, %v886
        %v888 = vmul.f32 %v880, 0.5
        %v889 = vmul.f32 %v887, 0.5
        %v890 = vmul.f32 %v870, %v870
        %v891 = vmul.f32 %v872, %v872
        %v892 = vsel %vm455, %v890, 0.0
        %v893 = vrot.slane %v892, 4
        %v894 = vadd.f32 %v892, %v893
        %v895 = vrot.slane %v894, 2
        %v896 = vadd.f32 %v894, %v895
        %v897 = vrot.slane %v896, 1
        %v898 = vadd.f32 %v896, %v897
        %v899 = vsel %vm455, %v891, 0.0
        %v900 = vrot.slane %v899, 4
        %v901 = vadd.f32 %v899, %v900
        %v902 = vrot.slane %v901, 2
        %v903 = vadd.f32 %v901, %v902
        %v904 = vrot.slane %v903, 1
        %v905 = vadd.f32 %v903, %v904
        %v906 = vmul.f32 %v898, 0.5
        %v907 = vmul.f32 %v905, 0.5
        %v908 = vld [vmem:[#allocation8] sm:$0xff]
        %v909 = vld [vmem:[#allocation8 + $0x8] sm:$0xff]
        %v910 = vld [vmem:[#allocation8 + $0x10] sm:$0xff]
        %v911 = vld [vmem:[#allocation8 + $0x18] sm:$0xff]
        %v912 = vld [vmem:[#allocation8 + $0x20] sm:$0xff]
        %v913 = vld [vmem:[#allocation8 + $0x28] sm:$0xff]
        %v914 = vld [vmem:[#allocation8 + $0x30] sm:$0xff]
        %v915 = vld [vmem:[#allocation8 + $0x38] sm:$0xff]
        %v916 = vld [vmem:[#allocation8 + $0x40] sm:$0xff]
        %v917 = vld [vmem:[#allocation8 + $0x48] sm:$0xff]
        %v918 = vld [vmem:[#allocation8 + $0x50] sm:$0xff]
        %v919 = vld [vmem:[#allocation8 + $0x58] sm:$0xff]
        %v920 = vld [vmem:[#allocation8 + $0x60] sm:$0xff]
        %v921 = vld [vmem:[#allocation8 + $0x68] sm:$0xff]
        %v922 = vld [vmem:[#allocation8 + $0x70] sm:$0xff]
        %v923 = vld [vmem:[#allocation8 + $0x78] sm:$0xff]
        %v924 = vld [vmem:[#allocation8 + $0x80] sm:$0xff]
        %v925 = vld [vmem:[#allocation8 + $0x88] sm:$0xff]
        %v926 = vld [vmem:[#allocation8 + $0x90] sm:$0xff]
        %v927 = vld [vmem:[#allocation8 + $0x98] sm:$0xff]
        %v928 = vld [vmem:[#allocation8 + $0xa0] sm:$0xff]
        %v929 = vld [vmem:[#allocation8 + $0xa8] sm:$0xff]
        %v930 = vld [vmem:[#allocation8 + $0xb0] sm:$0xff]
        %v931 = vld [vmem:[#allocation8 + $0xb8] sm:$0xff]
        %v932 = vld [vmem:[#allocation8 + $0xc0] sm:$0xff]
        %v933 = vld [vmem:[#allocation8 + $0xc8] sm:$0xff]
        %v934 = vld [vmem:[#allocation8 + $0xd0] sm:$0xff]
        %v935 = vld [vmem:[#allocation8 + $0xd8] sm:$0xff]
        %v936 = vld [vmem:[#allocation8 + $0xe0] sm:$0xff]
        %v937 = vld [vmem:[#allocation8 + $0xe8] sm:$0xff]
        %v938 = vld [vmem:[#allocation8 + $0xf0] sm:$0xff]
        %v939 = vld [vmem:[#allocation8 + $0xf8] sm:$0xff]
        %v940 = vld [vmem:[#allocation8 + $0x100] sm:$0xff]
        %v941 = vld [vmem:[#allocation8 + $0x108] sm:$0xff]
        %v942 = vld [vmem:[#allocation8 + $0x110] sm:$0xff]
        %v943 = vld [vmem:[#allocation8 + $0x118] sm:$0xff]
        %v944 = vld [vmem:[#allocation8 + $0x120] sm:$0xff]
        %v945 = vld [vmem:[#allocation8 + $0x128] sm:$0xff]
        %v946 = vld [vmem:[#allocation8 + $0x130] sm:$0xff]
        %v947 = vld [vmem:[#allocation8 + $0x138] sm:$0xff]
        %v948 = vld [vmem:[#allocation8 + $0x140] sm:$0xff]
        %v949 = vld [vmem:[#allocation8 + $0x148] sm:$0xff]
        %v950 = vld [vmem:[#allocation8 + $0x150] sm:$0xff]
        %v951 = vld [vmem:[#allocation8 + $0x158] sm:$0xff]
        %v952 = vld [vmem:[#allocation8 + $0x160] sm:$0xff]
        %v953 = vld [vmem:[#allocation8 + $0x168] sm:$0xff]
        %v954 = vld [vmem:[#allocation8 + $0x170] sm:$0xff]
        %v955 = vld [vmem:[#allocation8 + $0x178] sm:$0xff]
        %v956 = vld [vmem:[#allocation8 + $0x180] sm:$0xff]
        %v957 = vld [vmem:[#allocation8 + $0x188] sm:$0xff]
        %v958 = vld [vmem:[#allocation8 + $0x190] sm:$0xff]
        %v959 = vld [vmem:[#allocation8 + $0x198] sm:$0xff]
        %v960 = vld [vmem:[#allocation8 + $0x1a0] sm:$0xff]
        %v961 = vld [vmem:[#allocation8 + $0x1a8] sm:$0xff]
        %v962 = vld [vmem:[#allocation8 + $0x1b0] sm:$0xff]
        %v963 = vld [vmem:[#allocation8 + $0x1b8] sm:$0xff]
        %v964 = vld [vmem:[#allocation8 + $0x1c0] sm:$0xff]
        %v965 = vld [vmem:[#allocation8 + $0x1c8] sm:$0xff]
        %v966 = vld [vmem:[#allocation8 + $0x1d0] sm:$0xff]
        %v967 = vld [vmem:[#allocation8 + $0x1d8] sm:$0xff]
        %v968 = vld [vmem:[#allocation8 + $0x1e0] sm:$0xff]
        %v969 = vld [vmem:[#allocation8 + $0x1e8] sm:$0xff]
        %v970 = vld [vmem:[#allocation8 + $0x1f0] sm:$0xff]
        %v971 = vld [vmem:[#allocation8 + $0x1f8] sm:$0xff]
        %972 = vmatprep.subr.mxu0 %v909
        %973 = vmatpush1.msra.mxu0 %v908
        %974 = vmatprep.subr.mxu0 %v911
        %975 = vmatpush1.msra.mxu0 %v910
        %976 = vmatprep.subr.mxu0 %v913
        %977 = vmatpush1.msra.mxu0 %v912
        %978 = vmatprep.subr.mxu0 %v915
        %979 = vmatpush1.msra.mxu0 %v914
        %980 = vmatprep.subr.mxu0 %v917
        %981 = vmatpush1.msra.mxu0 %v916
        %982 = vmatprep.subr.mxu0 %v919
        %983 = vmatpush1.msra.mxu0 %v918
        %984 = vmatprep.subr.mxu0 %v921
        %985 = vmatpush1.msra.mxu0 %v920
        %986 = vmatprep.subr.mxu0 %v923
        %987 = vmatpush1.msra.mxu0 %v922
        %988 = vmatprep.subr.mxu0 %v925
        %989 = vmatpush1.msra.mxu0 %v924
        %990 = vmatprep.subr.mxu0 %v927
        %991 = vmatpush1.msra.mxu0 %v926
        %992 = vmatprep.subr.mxu0 %v929
        %993 = vmatpush1.msra.mxu0 %v928
        %994 = vmatprep.subr.mxu0 %v931
        %995 = vmatpush1.msra.mxu0 %v930
        %996 = vmatprep.subr.mxu0 %v933
        %997 = vmatpush1.msra.mxu0 %v932
        %998 = vmatprep.subr.mxu0 %v935
        %999 = vmatpush1.msra.mxu0 %v934
        %1000 = vmatprep.subr.mxu0 %v937
        %1001 = vmatpush1.msra.mxu0 %v936
        %1002 = vmatprep.subr.mxu0 %v939
        %1003 = vmatpush1.msra.mxu0 %v938
        %1004 = vmatprep.subr.mxu0 %v941
        %1005 = vmatpush1.msra.mxu0 %v940
        %1006 = vmatprep.subr.mxu0 %v943
        %1007 = vmatpush1.msra.mxu0 %v942
        %1008 = vmatprep.subr.mxu0 %v945
        %1009 = vmatpush1.msra.mxu0 %v944
        %1010 = vmatprep.subr.mxu0 %v947
        %1011 = vmatpush1.msra.mxu0 %v946
        %1012 = vmatprep.subr.mxu0 %v949
        %1013 = vmatpush1.msra.mxu0 %v948
        %1014 = vmatprep.subr.mxu0 %v951
        %1015 = vmatpush1.msra.mxu0 %v950
        %1016 = vmatprep.subr.mxu0 %v953
        %1017 = vmatpush1.msra.mxu0 %v952
        %1018 = vmatprep.subr.mxu0 %v955
        %1019 = vmatpush1.msra.mxu0 %v954
        %1020 = vmatprep.subr.mxu0 %v957
        %1021 = vmatpush1.msra.mxu0 %v956
        %1022 = vmatprep.subr.mxu0 %v959
        %1023 = vmatpush1.msra.mxu0 %v958
        %1024 = vmatprep.subr.mxu0 %v961
        %1025 = vmatpush1.msra.mxu0 %v960
        %1026 = vmatprep.subr.mxu0 %v963
        %1027 = vmatpush1.msra.mxu0 %v962
        %1028 = vmatprep.subr.mxu0 %v965
        %1029 = vmatpush1.msra.mxu0 %v964
        %1030 = vmatprep.subr.mxu0 %v967
        %1031 = vmatpush1.msra.mxu0 %v966
        %1032 = vmatprep.subr.mxu0 %v969
        %1033 = vmatpush1.msra.mxu0 %v968
        %1034 = vmatprep.subr.mxu0 %v971
        %1035 = vmatpush1.msra.mxu0 %v970
        %1036 = vmatprep.mubr.f32.mxu0 %v889
        %1037 = vmatmul.mubr.f32.gmra.mrb[0].mxu0 %v888
        %v1038 = vpop.f32.mrb[0].mxu0
        %v1039 = vadd.f32 0.0, %v1038
        %v1040 = vpop.f32.mrb[0].mxu0
        %v1041 = vadd.f32 0.0, %v1040
        %1042 = vdwg.mxu0
        %1043 = vmatprep.subr.mxu0 %v909
        %1044 = vmatpush1.msra.mxu0 %v908
        %1045 = vmatprep.subr.mxu0 %v911
        %1046 = vmatpush1.msra.mxu0 %v910
        %1047 = vmatprep.subr.mxu0 %v913
        %1048 = vmatpush1.msra.mxu0 %v912
        %1049 = vmatprep.subr.mxu0 %v915
        %1050 = vmatpush1.msra.mxu0 %v914
        %1051 = vmatprep.subr.mxu0 %v917
        %1052 = vmatpush1.msra.mxu0 %v916
        %1053 = vmatprep.subr.mxu0 %v919
        %1054 = vmatpush1.msra.mxu0 %v918
        %1055 = vmatprep.subr.mxu0 %v921
        %1056 = vmatpush1.msra.mxu0 %v920
        %1057 = vmatprep.subr.mxu0 %v923
        %1058 = vmatpush1.msra.mxu0 %v922
        %1059 = vmatprep.subr.mxu0 %v925
        %1060 = vmatpush1.msra.mxu0 %v924
        %1061 = vmatprep.subr.mxu0 %v927
        %1062 = vmatpush1.msra.mxu0 %v926
        %1063 = vmatprep.subr.mxu0 %v929
        %1064 = vmatpush1.msra.mxu0 %v928
        %1065 = vmatprep.subr.mxu0 %v931
        %1066 = vmatpush1.msra.mxu0 %v930
        %1067 = vmatprep.subr.mxu0 %v933
        %1068 = vmatpush1.msra.mxu0 %v932
        %1069 = vmatprep.subr.mxu0 %v935
        %1070 = vmatpush1.msra.mxu0 %v934
        %1071 = vmatprep.subr.mxu0 %v937
        %1072 = vmatpush1.msra.mxu0 %v936
        %1073 = vmatprep.subr.mxu0 %v939
        %1074 = vmatpush1.msra.mxu0 %v938
        %1075 = vmatprep.subr.mxu0 %v941
        %1076 = vmatpush1.msra.mxu0 %v940
        %1077 = vmatprep.subr.mxu0 %v943
        %1078 = vmatpush1.msra.mxu0 %v942
        %1079 = vmatprep.subr.mxu0 %v945
        %1080 = vmatpush1.msra.mxu0 %v944
        %1081 = vmatprep.subr.mxu0 %v947
        %1082 = vmatpush1.msra.mxu0 %v946
        %1083 = vmatprep.subr.mxu0 %v949
        %1084 = vmatpush1.msra.mxu0 %v948
        %1085 = vmatprep.subr.mxu0 %v951
        %1086 = vmatpush1.msra.mxu0 %v950
        %1087 = vmatprep.subr.mxu0 %v953
        %1088 = vmatpush1.msra.mxu0 %v952
        %1089 = vmatprep.subr.mxu0 %v955
        %1090 = vmatpush1.msra.mxu0 %v954
        %1091 = vmatprep.subr.mxu0 %v957
        %1092 = vmatpush1.msra.mxu0 %v956
        %1093 = vmatprep.subr.mxu0 %v959
        %1094 = vmatpush1.msra.mxu0 %v958
        %1095 = vmatprep.subr.mxu0 %v961
        %1096 = vmatpush1.msra.mxu0 %v960
        %1097 = vmatprep.subr.mxu0 %v963
        %1098 = vmatpush1.msra.mxu0 %v962
        %1099 = vmatprep.subr.mxu0 %v965
        %1100 = vmatpush1.msra.mxu0 %v964
        %1101 = vmatprep.subr.mxu0 %v967
        %1102 = vmatpush1.msra.mxu0 %v966
        %1103 = vmatprep.subr.mxu0 %v969
        %1104 = vmatpush1.msra.mxu0 %v968
        %1105 = vmatprep.subr.mxu0 %v971
        %1106 = vmatpush1.msra.mxu0 %v970
        %1107 = vmatprep.mubr.f32.mxu0 %v907
        %1108 = vmatmul.mubr.f32.gmra.mrb[0].mxu0 %v906
        %v1109 = vpop.f32.mrb[0].mxu0
        %v1110 = vadd.f32 0.0, %v1109
        %v1111 = vpop.f32.mrb[0].mxu0
        %v1112 = vadd.f32 0.0, %v1111
        %1113 = vdwg.mxu0
        %v1114 = vmul.f32 %v1039, %v1039
        %v1115 = vmul.f32 %v1041, %v1041
        %v1116 = vsub.f32 %v1110, %v1114
        %v1117 = vsub.f32 %v1112, %v1115
        %v1118 = vadd.f32 %v1116, 1e-05
        %v1119 = vadd.f32 %v1117, 1e-05
        %v1120 = vrsqrt.pop %v1118
        %v1121 = vrsqrt.pop %v1119
        %s1122 = scalar_lea.vmem %s307, 2 [#allocation7]
        %v1123 = vld [vmem:[%s1122] sm:$0x3]
        %v1125 = vlaneseq
        %v1126 = vshrl.u32 %v1125, 7
        %v1127 = vsub.s32 0, %v1126
        %v1128 = vrot.slane %v1123, %v1127
        %v1129 = vlaneseq
        %v1130 = vshrl.u32 %v1129, 7
        %v1131 = vsub.s32 1, %v1130
        %v1132 = vrot.slane %v1123, %v1131
        %v1135 = vmul.f32 %v1120, %v1128
        %v1136 = vmul.f32 %v1121, %v1132
        %s1137 = scalar_lea.vmem %s360, 2
        %v1138 = vld [vmem:[%s1137] sm:$0x3]
        %v1139 = vmul.f32 %v1039, %v1135
        %v1140 = vmul.f32 %v1041, %v1136
        %v1143 = vcombine.low %v1139, %v1140
        %v1145 = vunpack.c.l.s4 1966171168
        %v1146 = vunpack.c.0.s8 %v1145
        %v1147 = vlaneseq
        %v1148 = vshrl.u32 %v1147, 7
        %v1149 = vsub.s32 %v1146, %v1148
        %v1150 = vrot.slane %v1143, %v1149
        %v1152 = vunpack.c.l.s4 1966171168
        %v1153 = vunpack.c.0.s8 %v1152
        %v1154 = vlaneseq
        %v1155 = vshrl.u32 %v1154, 7
        %v1156 = vsub.s32 %v1153, %v1155
        %v1157 = vrot.slane %v1150, %v1156
        %v1159 = vsub.f32 %v1138, %v1157
        %v1160 = vlaneseq
        %v1161 = vshrl.u32 %v1160, 7
        %v1162 = vsub.s32 0, %v1161
        %v1163 = vrot.slane %v1135, %v1162
        %v1164 = vlaneseq
        %v1165 = vshrl.u32 %v1164, 7
        %v1166 = vsub.s32 0, %v1165
        %v1167 = vrot.slane %v1136, %v1166
        %v1168 = vmul.f32 %v870, %v1163
        %v1169 = vmul.f32 %v872, %v1167
        %v1171 = vlaneseq
        %v1172 = vshrl.u32 %v1171, 7
        %v1173 = vsub.s32 0, %v1172
        %v1174 = vrot.slane %v1159, %v1173
        %v1175 = vlaneseq
        %v1176 = vshrl.u32 %v1175, 7
        %v1177 = vsub.s32 1, %v1176
        %v1178 = vrot.slane %v1159, %v1177
        %v1181 = vadd.f32 %v1168, %v1174
        %v1182 = vadd.f32 %v1169, %v1178
        %vm1183 = vcmp.ge.f32.partialorder %v1181, 0.0
        %vm1184 = vcmp.ge.f32.partialorder %v1182, 0.0
        %v1185 = vmul.f32 %v1181, 0.2
        %v1186 = vmul.f32 %v1182, 0.2
        %v1187 = vsel %vm1183, %v1181, %v1185
        %v1188 = vsel %vm1184, %v1182, %v1186
        %v1191 = vcombine.low %v1187, %v1188
        %v1193 = vunpack.c.l.s4 1983009808
        %v1194 = vunpack.c.0.s8 %v1193
        %v1195 = vlaneseq
        %v1196 = vshrl.u32 %v1195, 7
        %v1197 = vsub.s32 %v1194, %v1196
        %v1198 = vrot.slane %v1191, %v1197
        %s1200 = scalar_lea.vmem %s352, 4 [#allocation10]
        %1201 = vst [vmem:[%s1200] sm:$0xf] %v1198
        %s1202 = sand.u32 %s159, 1
        %s1203 = scalar_lea.sflag [#allocation4], %s1202
        %s1204 = sand.u32 %s159, 1
        %s1205 = smul.addr %s1204, 8
        %s1206 = scalar_lea.vmem [#allocation10], %s1205
        // Predicated region
        $region57: #{tpu_custom_call.1} parent=39 // pred_check
          %p1207 = pneg %p169
        $region58: #{tpu_custom_call.1} parent=39 // pred_check_branch
          %1209 = sbr.rel (%p1207) target = $region60
        $region59: #{tpu_custom_call.1} parent=39 // pred_region
          %s1210 = smul.u32 2, %s26
          %s1212 = ssub.s32 128, 128
          %1213 = vsyncadd %s1203, %s1212
          %s1214 = smul.addr %s1210, 2
          %s1215 = smul.addr %s1214, 32
          %s1216 = scalar_lea.hbm %s5, %s1215
          %s1217 = sshll.u32 %s1206, 4
          %s1218 = int_to_ptr.vmem [resolvable:$true] %s1217
          %1223 = dma.vmem_to_hbm [thread:$0]  %s1218, 128, %s1216, %s1203, 64, 64, 4
        $region60: #{tpu_custom_call.1} parent=39 // pred_fallthru
          _
      $region40: #{tpu_custom_call.1} parent=5 // pred_fallthru
        _
      %p1224 = scmp.le.s32.totalorder 2, %s21
      // Predicated region
      $region61: #{tpu_custom_call.1} parent=5 // pred_check
        %p1225 = pneg %p1224
      $region62: #{tpu_custom_call.1} parent=5 // pred_check_branch
        %1227 = sbr.rel (%p1225) target = $region64
      $region63: #{tpu_custom_call.1} parent=5 // pred_region
        %s1228 = ssub.s32 %s21, 2
        // Predicated region
        $region65: #{tpu_custom_call.1} parent=63 // pred_check
          %p1229 = pneg %p175
        $region66: #{tpu_custom_call.1} parent=63 // pred_check_branch
          %1231 = sbr.rel (%p1229) target = $region68
        $region67: #{tpu_custom_call.1} parent=63 // pred_region
          %s1232 = sand.u32 %s160, 1
          %s1233 = scalar_lea.sflag [#allocation4], %s1232
          %s1234 = sand.u32 %s160, 1
          %s1235 = smul.addr %s1234, 8
          %s1236 = scalar_lea.vmem [#allocation10], %s1235
          %1237 = dma.done %s1233, 128
        $region68: #{tpu_custom_call.1} parent=63 // pred_fallthru
          _
      $region64: #{tpu_custom_call.1} parent=5 // pred_fallthru
        _
    $region6: #{tpu_custom_call.1} parent=1 // loop_footer
      %s25 = sadd.s32 1, %s21
    $region7: #{tpu_custom_call.1} parent=1 // loop_footer_branch
      %20 = sbr.rel target = $region3
    $region8: #{tpu_custom_call.1} parent=1 // loop_exit
      _
    %1238 = vsyncpa [#allocation3], 1
    %s1239 = scalar_lea.sflag [#allocation3], 1
    %1240 = vsyncpa %s1239, 1
    %1241 = vsyncpa [#allocation6], 1
    %s1242 = scalar_lea.sflag [#allocation6], 1
    %1243 = vsyncpa %s1242, 1
    %1244 = vsyncpa [#allocation9], 1
    %1245 = vsyncpa [#allocation4], 1
    %s1246 = scalar_lea.sflag [#allocation4], 1
    %1247 = vsyncpa %s1246, 1

</llo_original>
